<compile_context>
chip_gen: v5e
topology: v5e:2x2
jax: 0.10.0
libtpu: 0.0.40
codegen_flags: <defaults>
</compile_context>

<pallas_src>
import functools

import jax
import jax.numpy as jnp
from jax.experimental import pallas as pl
from jax.experimental.pallas import tpu as pltpu

LANE = 128                     # lane width: all GEMM output dims padded to this
DEFAULT_TM = 512               # M-tile rows (review: 512-2048; <=1024 for v7x VMEM)
VMEM_LIMIT_BYTES = 32 * 1024 * 1024


def _compiler_params(dimension_semantics):
    # pltpu.CompilerParams on current JAX; graceful fallback for older releases.
    cp_cls = getattr(pltpu, "CompilerParams", None) or getattr(pltpu, "TPUCompilerParams")
    return cp_cls(dimension_semantics=dimension_semantics,
                  vmem_limit_bytes=VMEM_LIMIT_BYTES)


def _pad2d(a, rows, cols):
    return jnp.pad(a, ((0, rows - a.shape[0]), (0, cols - a.shape[1])))


# ----------------------------- Pallas kernels ------------------------------

def _matmul_bias_act_kernel(x_ref, w_ref, b_ref, o_ref, *, relu):
    # MXU: bf16 x bf16 -> f32 accumulate.  VPU epilogue (bias + ReLU) kept in f32.
    acc = jnp.dot(x_ref[...], w_ref[...], preferred_element_type=jnp.float32)
    acc = acc + b_ref[...]
    if relu:
        acc = jnp.maximum(acc, 0.0)
    o_ref[...] = acc.astype(o_ref.dtype)


def matmul_bias_act(x, w, b, *, relu, tm=DEFAULT_TM):
    """y = relu?(x @ w + b).  x:(M,K) bf16, w:(K,Np) bf16, b:(1,Np) f32, Np % 128 == 0.
    Tiled over M (double-buffered pipeline); w and b stay resident in VMEM."""
    m, k = x.shape
    np_ = w.shape[1]
    tm = min(tm, m)
    return pl.pallas_call(
        functools.partial(_matmul_bias_act_kernel, relu=relu),
        out_shape=jax.ShapeDtypeStruct((m, np_), jnp.float32),
        grid=(pl.cdiv(m, tm),),
        in_specs=[
            pl.BlockSpec((tm, k), lambda i: (i, 0)),      # only M is tiled
            pl.BlockSpec((k, np_), lambda i: (0, 0)),     # weights resident
            pl.BlockSpec((1, np_), lambda i: (0, 0)),     # bias resident
        ],
        out_specs=pl.BlockSpec((tm, np_), lambda i: (i, 0)),
        compiler_params=_compiler_params(("parallel",)),
    )(x, w, b)


def _maxpool2x2_kernel(x_ref, o_ref, *, c):
    # x block: (1, Ho/2, 2, Wo/2, 2c).  Lane dim packs (w-parity, channel); the
    # h-parity sits in a leading dim, so the pool is two cheap elementwise maxes.
    x = x_ref[0]                              # (Ho/2, 2, Wo/2, 2c)
    m = jnp.maximum(x[:, 0], x[:, 1])         # max over the two conv rows
    o_ref[0] = jnp.maximum(m[:, :, :c], m[:, :, c:])   # max over adjacent cols (lane-aligned)


def maxpool2x2(y_rows, n, ho, wo, c):
    """2x2 / stride-2 max pool.  y_rows: (n*ho*wo, c) conv GEMM output in row-major
    (n, h, w) order, c % 128 == 0.  Returns (n, ho//2, wo//2, c).  Reads the conv
    activation exactly once (no strided HBM slices)."""
    hp, wp = ho // 2, wo // 2
    x5 = y_rows.reshape(n, hp, 2, wp, 2 * c)            # free row-major reshape
    return pl.pallas_call(
        functools.partial(_maxpool2x2_kernel, c=c),
        out_shape=jax.ShapeDtypeStruct((n, hp, wp, c), y_rows.dtype),
        grid=(n,),
        in_specs=[pl.BlockSpec((1, hp, 2, wp, 2 * c), lambda i: (i, 0, 0, 0, 0))],
        out_specs=pl.BlockSpec((1, hp, wp, c), lambda i: (i, 0, 0, 0)),
        compiler_params=_compiler_params(("parallel",)),
    )(x5)


def _mlp3_kernel(x_ref, w1_ref, b1_ref, w2_ref, b2_ref, w3_ref, b3_ref, o_ref):
    h = jnp.dot(x_ref[...], w1_ref[...], preferred_element_type=jnp.float32)
    h = jnp.maximum(h + b1_ref[...], 0.0)                                    # fc1 + ReLU
    h = jnp.dot(h.astype(jnp.bfloat16), w2_ref[...], preferred_element_type=jnp.float32)
    h = jnp.maximum(h + b2_ref[...], 0.0)                                    # fc2 + ReLU
    h = jnp.dot(h.astype(jnp.bfloat16), w3_ref[...], preferred_element_type=jnp.float32)
    o_ref[...] = (h + b3_ref[...]).astype(o_ref.dtype)                       # fc3 (no ReLU)


def fused_mlp(x, w1, b1, w2, b2, w3, b3, *, tb=DEFAULT_TM):
    """fc1->relu->fc2->relu->fc3 in a single kernel; padded weights resident in VMEM."""
    bsz, k = x.shape
    np_ = w1.shape[1]
    tb = min(tb, bsz)
    const = lambda shape: pl.BlockSpec(shape, lambda i, _s=len(shape): (0,) * _s)
    return pl.pallas_call(
        _mlp3_kernel,
        out_shape=jax.ShapeDtypeStruct((bsz, np_), jnp.float32),
        grid=(pl.cdiv(bsz, tb),),
        in_specs=[
            pl.BlockSpec((tb, k), lambda i: (i, 0)),
            const(w1.shape), const(b1.shape),
            const(w2.shape), const(b2.shape),
            const(w3.shape), const(b3.shape),
        ],
        out_specs=pl.BlockSpec((tb, np_), lambda i: (i, 0)),
        compiler_params=_compiler_params(("parallel",)),
    )(x, w1, b1, w2, b2, w3, b3)


# ------------------------------- conv as GEMM ------------------------------

def im2col(x, k):
    """x: (N,H,W,C) -> (N*Ho*Wo, k*k*C); feature order (kh, kw, C) matches weight packing."""
    n, h, w, c = x.shape
    ho, wo = h - k + 1, w - k + 1
    patches = jnp.stack(
        [x[:, i:i + ho, j:j + wo, :] for i in range(k) for j in range(k)], axis=3)
    return patches.reshape(n * ho * wo, k * k * c), ho, wo


def conv_relu_pool(x, w_packed, b_packed):
    """Valid 5x5 conv, stride 1, fused bias+ReLU in the GEMM, then 2x2 max pool.
    x: (N,H,W,Cin) bf16.  Returns (N, Ho//2, Wo//2, 128) f32 (channels 128-padded)."""
    n = x.shape[0]
    # TODO(synk): fuse im2col + the 2x2 pool into the conv GEMM kernel itself so the
    # k*k-inflated patch matrix and full-res conv output never round-trip HBM.
    cols, ho, wo = im2col(x, 5)                                  # bf16 patches
    y = matmul_bias_act(cols, w_packed, b_packed, relu=True)     # (n*ho*wo, 128) f32
    return maxpool2x2(y, n, ho, wo, LANE)


# --------------------------------- Net --------------------------------------

def init_params():
    """Deterministic init; shapes/layouts match the PyTorch module."""
    keys = jax.random.split(jax.random.PRNGKey(42), 10)

    def u(key, shape, fan_in):
        bound = 1.0 / jnp.sqrt(fan_in)
        return jax.random.uniform(key, shape, jnp.float32, -bound, bound)

    return {
        "conv1_w": u(keys[0], (6, 3, 5, 5), 3 * 5 * 5),
        "conv1_b": u(keys[1], (6,), 3 * 5 * 5),
        "conv2_w": u(keys[2], (16, 6, 5, 5), 6 * 5 * 5),
        "conv2_b": u(keys[3], (16,), 6 * 5 * 5),
        "fc1_w": u(keys[4], (120, 400), 400),
        "fc1_b": u(keys[5], (120,), 400),
        "fc2_w": u(keys[6], (84, 120), 120),
        "fc2_b": u(keys[7], (84,), 120),
        "fc3_w": u(keys[8], (10, 84), 84),
        "fc3_b": u(keys[9], (10,), 84),
    }


def prepare_params(p):
    """One-time packing (hoisted out of the forward pass):
      * conv w: (Cout,Cin,kh,kw) -> (kh*kw*Cin, 128) bf16, zero-padded output lanes
      * fc w:   transposed, rows/cols zero-padded to 128, bf16
      * biases: (1, 128) f32, zero-padded."""
    def conv_pack(w):
        cout, cin, kh, kw = w.shape
        w2 = jnp.transpose(w, (2, 3, 1, 0)).reshape(kh * kw * cin, cout)
        return _pad2d(w2, kh * kw * cin, LANE).astype(jnp.bfloat16)

    def fc_pack(w, rows):
        return _pad2d(w.T, rows, LANE).astype(jnp.bfloat16)

    def bias_pack(b):
        return _pad2d(b.reshape(1, -1), 1, LANE).astype(jnp.float32)

    return {
        "conv1_w": conv_pack(p["conv1_w"]), "conv1_b": bias_pack(p["conv1_b"]),
        "conv2_w": conv_pack(p["conv2_w"]), "conv2_b": bias_pack(p["conv2_b"]),
        "fc1_w": fc_pack(p["fc1_w"], 400),  "fc1_b": bias_pack(p["fc1_b"]),
        "fc2_w": fc_pack(p["fc2_w"], LANE), "fc2_b": bias_pack(p["fc2_b"]),
        "fc3_w": fc_pack(p["fc3_w"], LANE), "fc3_b": bias_pack(p["fc3_b"]),
    }


def net_forward(p, x_nchw):
    """x_nchw: (N, 3, 32, 32) f32 -> (N, 10) f32.  Matches PyTorch Net.forward."""
    n = x_nchw.shape[0]
    x = jnp.transpose(x_nchw, (0, 2, 3, 1)).astype(jnp.bfloat16)     # NCHW -> NHWC (MXU dtype)

    x = conv_relu_pool(x, p["conv1_w"], p["conv1_b"])                # (N,14,14,128) f32
    x = x[..., :6].astype(jnp.bfloat16)                              # drop lane padding
    x = conv_relu_pool(x, p["conv2_w"], p["conv2_b"])                # (N,5,5,128) f32
    x = x[..., :16]

    # PyTorch flattens in NCHW order: x.view(-1, 16*5*5)
    x = jnp.transpose(x, (0, 3, 1, 2)).reshape(n, 16 * 5 * 5).astype(jnp.bfloat16)

    out = fused_mlp(x, p["fc1_w"], p["fc1_b"], p["fc2_w"], p["fc2_b"],
                    p["fc3_w"], p["fc3_b"])                          # (N,128) f32
    return out[:, :10]


if __name__ == "__main__":
    params = prepare_params(init_params())        # weight packing hoisted out of forward
    x = jax.random.normal(jax.random.PRNGKey(0), (2, 3, 32, 32), jnp.float32)
    fwd = jax.jit(net_forward)
    out = jax.block_until_ready(fwd(params, x))
    assert out.shape == (2, 10) and out.dtype == jnp.float32
    assert bool(jnp.all(jnp.isfinite(out)))
    print("KERNEL_OK")
</pallas_src>

<mosaic_0001>
module attributes {stable_mosaic.version = 11 : i64} {
  func.func @_matmul_bias_act_kernel(%arg0: i32, %arg1: memref<512x75xbf16, #tpu.memory_space<vmem>>, %arg2: memref<75x128xbf16, #tpu.memory_space<vmem>>, %arg3: memref<1x128xf32, #tpu.memory_space<vmem>>, %arg4: memref<512x128xf32, #tpu.memory_space<vmem>>) attributes {dimension_semantics = [#tpu.dimension_semantics<parallel>], iteration_bounds = array<i64: 4>, scalar_prefetch = 0 : i64, scratch_operands = 0 : i64, tpu.core_type = #tpu.core_type<tc>, window_params = [{transform_indices = @transform_0, window_bounds = array<i64: 512, 75>}, {pipeline_mode = #tpu.pipeline_mode<synchronous>, transform_indices = @transform_1, window_bounds = array<i64: 75, 128>}, {pipeline_mode = #tpu.pipeline_mode<synchronous>, transform_indices = @transform_2, window_bounds = array<i64: 1, 128>}, {transform_indices = @transform_3, window_bounds = array<i64: 512, 128>}]} {
    %c0 = arith.constant 0 : index
    %c0_0 = arith.constant 0 : index
    %0 = vector.load %arg1[%c0, %c0_0] : memref<512x75xbf16, #tpu.memory_space<vmem>>, vector<512x75xbf16>
    %c0_1 = arith.constant 0 : index
    %c0_2 = arith.constant 0 : index
    %1 = vector.load %arg2[%c0_1, %c0_2] : memref<75x128xbf16, #tpu.memory_space<vmem>>, vector<75x128xbf16>
    %cst = arith.constant dense<0.000000e+00> : vector<512x128xf32>
    %2 = tpu.matmul %0, %1, %cst {dimension_numbers = #tpu.dot_dimension_numbers<[1], [0], [0], [1], [0, 0, 1, 1], [], []>} : vector<512x75xbf16>, vector<75x128xbf16>, vector<512x128xf32> -> vector<512x128xf32>
    %c0_3 = arith.constant 0 : index
    %c0_4 = arith.constant 0 : index
    %3 = vector.load %arg3[%c0_3, %c0_4] : memref<1x128xf32, #tpu.memory_space<vmem>>, vector<1x128xf32>
    %4 = vector.broadcast %3 : vector<1x128xf32> to vector<512x128xf32>
    %5 = arith.addf %2, %4 : vector<512x128xf32>
    %cst_5 = arith.constant 0.000000e+00 : f32
    %6 = vector.broadcast %cst_5 : f32 to vector<512x128xf32>
    %7 = arith.maximumf %5, %6 : vector<512x128xf32>
    %c0_6 = arith.constant 0 : index
    %c0_7 = arith.constant 0 : index
    %8 = vector.load %arg4[%c0_6, %c0_7] : memref<512x128xf32, #tpu.memory_space<vmem>>, vector<512x128xf32>
    tpu.vector_store %arg4[%c0_6, %c0_7], %7 {strides = array<i32>} : memref<512x128xf32, #tpu.memory_space<vmem>>, vector<512x128xf32>,
    return
  }
  func.func @transform_0(%arg0: i32) -> (i32, i32) {
    %c0_i32 = arith.constant 0 : i32
    %c0_i32_0 = arith.constant 0 : i32
    return %arg0, %c0_i32 : i32, i32
  }
  func.func @transform_1(%arg0: i32) -> (i32, i32) {
    %c0_i32 = arith.constant 0 : i32
    %c0_i32_0 = arith.constant 0 : i32
    %c0_i32_1 = arith.constant 0 : i32
    return %c0_i32, %c0_i32_0 : i32, i32
  }
  func.func @transform_2(%arg0: i32) -> (i32, i32) {
    %c0_i32 = arith.constant 0 : i32
    %c0_i32_0 = arith.constant 0 : i32
    %c0_i32_1 = arith.constant 0 : i32
    return %c0_i32, %c0_i32_0 : i32, i32
  }
  func.func @transform_3(%arg0: i32) -> (i32, i32) {
    %c0_i32 = arith.constant 0 : i32
    %c0_i32_0 = arith.constant 0 : i32
    return %arg0, %c0_i32 : i32, i32
  }
}

module attributes {stable_mosaic.version = 11 : i64} {
  func.func @_maxpool2x2_kernel(%arg0: i32, %arg1: memref<1x14x2x14x256xf32, #tpu.memory_space<vmem>>, %arg2: memref<1x14x14x128xf32, #tpu.memory_space<vmem>>) attributes {dimension_semantics = [#tpu.dimension_semantics<parallel>], iteration_bounds = array<i64: 2>, scalar_prefetch = 0 : i64, scratch_operands = 0 : i64, tpu.core_type = #tpu.core_type<tc>, window_params = [{transform_indices = @transform_0, window_bounds = array<i64: 1, 14, 2, 14, 256>}, {transform_indices = @transform_1, window_bounds = array<i64: 1, 14, 14, 128>}]} {
    %c0 = arith.constant 0 : index
    %c0_0 = arith.constant 0 : index
    %c0_1 = arith.constant 0 : index
    %c0_2 = arith.constant 0 : index
    %c0_3 = arith.constant 0 : index
    %0 = vector.load %arg1[%c0, %c0_0, %c0_1, %c0_2, %c0_3] : memref<1x14x2x14x256xf32, #tpu.memory_space<vmem>>, vector<1x14x2x14x256xf32>
    %1 = vector.shape_cast %0 : vector<1x14x2x14x256xf32> to vector<14x2x14x256xf32>
    %2 = vector.extract_strided_slice %1 {offsets = [0, 0, 0, 0], sizes = [14, 1, 14, 256], strides = [1, 1, 1, 1]} : vector<14x2x14x256xf32> to vector<14x1x14x256xf32>
    %3 = vector.shape_cast %2 : vector<14x1x14x256xf32> to vector<14x14x256xf32>
    %4 = vector.extract_strided_slice %1 {offsets = [0, 1, 0, 0], sizes = [14, 1, 14, 256], strides = [1, 1, 1, 1]} : vector<14x2x14x256xf32> to vector<14x1x14x256xf32>
    %5 = vector.shape_cast %4 : vector<14x1x14x256xf32> to vector<14x14x256xf32>
    %6 = arith.maximumf %3, %5 : vector<14x14x256xf32>
    %7 = vector.extract_strided_slice %6 {offsets = [0, 0, 0], sizes = [14, 14, 128], strides = [1, 1, 1]} : vector<14x14x256xf32> to vector<14x14x128xf32>
    %8 = vector.extract_strided_slice %6 {offsets = [0, 0, 128], sizes = [14, 14, 128], strides = [1, 1, 1]} : vector<14x14x256xf32> to vector<14x14x128xf32>
    %9 = arith.maximumf %7, %8 : vector<14x14x128xf32>
    %c0_4 = arith.constant 0 : index
    %c0_5 = arith.constant 0 : index
    %c0_6 = arith.constant 0 : index
    %c0_7 = arith.constant 0 : index
    %10 = vector.load %arg2[%c0_4, %c0_5, %c0_6, %c0_7] : memref<1x14x14x128xf32, #tpu.memory_space<vmem>>, vector<1x14x14x128xf32>
    %11 = vector.shape_cast %10 : vector<1x14x14x128xf32> to vector<14x14x128xf32>
    %12 = vector.shape_cast %9 : vector<14x14x128xf32> to vector<1x14x14x128xf32>
    tpu.vector_store %arg2[%c0_4, %c0_5, %c0_6, %c0_7], %12 {strides = array<i32>} : memref<1x14x14x128xf32, #tpu.memory_space<vmem>>, vector<1x14x14x128xf32>,
    return
  }
  func.func @transform_0(%arg0: i32) -> (i32, i32, i32, i32, i32) {
    %c0_i32 = arith.constant 0 : i32
    %c0_i32_0 = arith.constant 0 : i32
    %c0_i32_1 = arith.constant 0 : i32
    %c0_i32_2 = arith.constant 0 : i32
    %c0_i32_3 = arith.constant 0 : i32
    return %arg0, %c0_i32, %c0_i32_0, %c0_i32_1, %c0_i32_2 : i32, i32, i32, i32, i32
  }
  func.func @transform_1(%arg0: i32) -> (i32, i32, i32, i32) {
    %c0_i32 = arith.constant 0 : i32
    %c0_i32_0 = arith.constant 0 : i32
    %c0_i32_1 = arith.constant 0 : i32
    %c0_i32_2 = arith.constant 0 : i32
    return %arg0, %c0_i32, %c0_i32_0, %c0_i32_1 : i32, i32, i32, i32
  }
}

module attributes {stable_mosaic.version = 11 : i64} {
  func.func @_matmul_bias_act_kernel(%arg0: i32, %arg1: memref<200x150xbf16, #tpu.memory_space<vmem>>, %arg2: memref<150x128xbf16, #tpu.memory_space<vmem>>, %arg3: memref<1x128xf32, #tpu.memory_space<vmem>>, %arg4: memref<200x128xf32, #tpu.memory_space<vmem>>) attributes {dimension_semantics = [#tpu.dimension_semantics<parallel>], iteration_bounds = array<i64: 1>, scalar_prefetch = 0 : i64, scratch_operands = 0 : i64, tpu.core_type = #tpu.core_type<tc>, window_params = [{transform_indices = @transform_0, window_bounds = array<i64: 200, 150>}, {pipeline_mode = #tpu.pipeline_mode<synchronous>, transform_indices = @transform_1, window_bounds = array<i64: 150, 128>}, {pipeline_mode = #tpu.pipeline_mode<synchronous>, transform_indices = @transform_2, window_bounds = array<i64: 1, 128>}, {transform_indices = @transform_3, window_bounds = array<i64: 200, 128>}]} {
    %c0 = arith.constant 0 : index
    %c0_0 = arith.constant 0 : index
    %0 = vector.load %arg1[%c0, %c0_0] : memref<200x150xbf16, #tpu.memory_space<vmem>>, vector<200x150xbf16>
    %c0_1 = arith.constant 0 : index
    %c0_2 = arith.constant 0 : index
    %1 = vector.load %arg2[%c0_1, %c0_2] : memref<150x128xbf16, #tpu.memory_space<vmem>>, vector<150x128xbf16>
    %cst = arith.constant dense<0.000000e+00> : vector<200x128xf32>
    %2 = tpu.matmul %0, %1, %cst {dimension_numbers = #tpu.dot_dimension_numbers<[1], [0], [0], [1], [0, 0, 1, 1], [], []>} : vector<200x150xbf16>, vector<150x128xbf16>, vector<200x128xf32> -> vector<200x128xf32>
    %c0_3 = arith.constant 0 : index
    %c0_4 = arith.constant 0 : index
    %3 = vector.load %arg3[%c0_3, %c0_4] : memref<1x128xf32, #tpu.memory_space<vmem>>, vector<1x128xf32>
    %4 = vector.broadcast %3 : vector<1x128xf32> to vector<200x128xf32>
    %5 = arith.addf %2, %4 : vector<200x128xf32>
    %cst_5 = arith.constant 0.000000e+00 : f32
    %6 = vector.broadcast %cst_5 : f32 to vector<200x128xf32>
    %7 = arith.maximumf %5, %6 : vector<200x128xf32>
    %c0_6 = arith.constant 0 : index
    %c0_7 = arith.constant 0 : index
    %8 = vector.load %arg4[%c0_6, %c0_7] : memref<200x128xf32, #tpu.memory_space<vmem>>, vector<200x128xf32>
    tpu.vector_store %arg4[%c0_6, %c0_7], %7 {strides = array<i32>} : memref<200x128xf32, #tpu.memory_space<vmem>>, vector<200x128xf32>,
    return
  }
  func.func @transform_0(%arg0: i32) -> (i32, i32) {
    %c0_i32 = arith.constant 0 : i32
    %c0_i32_0 = arith.constant 0 : i32
    return %arg0, %c0_i32 : i32, i32
  }
  func.func @transform_1(%arg0: i32) -> (i32, i32) {
    %c0_i32 = arith.constant 0 : i32
    %c0_i32_0 = arith.constant 0 : i32
    %c0_i32_1 = arith.constant 0 : i32
    return %c0_i32, %c0_i32_0 : i32, i32
  }
  func.func @transform_2(%arg0: i32) -> (i32, i32) {
    %c0_i32 = arith.constant 0 : i32
    %c0_i32_0 = arith.constant 0 : i32
    %c0_i32_1 = arith.constant 0 : i32
    return %c0_i32, %c0_i32_0 : i32, i32
  }
  func.func @transform_3(%arg0: i32) -> (i32, i32) {
    %c0_i32 = arith.constant 0 : i32
    %c0_i32_0 = arith.constant 0 : i32
    return %arg0, %c0_i32 : i32, i32
  }
}

module attributes {stable_mosaic.version = 11 : i64} {
  func.func @_maxpool2x2_kernel(%arg0: i32, %arg1: memref<1x5x2x5x256xf32, #tpu.memory_space<vmem>>, %arg2: memref<1x5x5x128xf32, #tpu.memory_space<vmem>>) attributes {dimension_semantics = [#tpu.dimension_semantics<parallel>], iteration_bounds = array<i64: 2>, scalar_prefetch = 0 : i64, scratch_operands = 0 : i64, tpu.core_type = #tpu.core_type<tc>, window_params = [{transform_indices = @transform_0, window_bounds = array<i64: 1, 5, 2, 5, 256>}, {transform_indices = @transform_1, window_bounds = array<i64: 1, 5, 5, 128>}]} {
    %c0 = arith.constant 0 : index
    %c0_0 = arith.constant 0 : index
    %c0_1 = arith.constant 0 : index
    %c0_2 = arith.constant 0 : index
    %c0_3 = arith.constant 0 : index
    %0 = vector.load %arg1[%c0, %c0_0, %c0_1, %c0_2, %c0_3] : memref<1x5x2x5x256xf32, #tpu.memory_space<vmem>>, vector<1x5x2x5x256xf32>
    %1 = vector.shape_cast %0 : vector<1x5x2x5x256xf32> to vector<5x2x5x256xf32>
    %2 = vector.extract_strided_slice %1 {offsets = [0, 0, 0, 0], sizes = [5, 1, 5, 256], strides = [1, 1, 1, 1]} : vector<5x2x5x256xf32> to vector<5x1x5x256xf32>
    %3 = vector.shape_cast %2 : vector<5x1x5x256xf32> to vector<5x5x256xf32>
    %4 = vector.extract_strided_slice %1 {offsets = [0, 1, 0, 0], sizes = [5, 1, 5, 256], strides = [1, 1, 1, 1]} : vector<5x2x5x256xf32> to vector<5x1x5x256xf32>
    %5 = vector.shape_cast %4 : vector<5x1x5x256xf32> to vector<5x5x256xf32>
    %6 = arith.maximumf %3, %5 : vector<5x5x256xf32>
    %7 = vector.extract_strided_slice %6 {offsets = [0, 0, 0], sizes = [5, 5, 128], strides = [1, 1, 1]} : vector<5x5x256xf32> to vector<5x5x128xf32>
    %8 = vector.extract_strided_slice %6 {offsets = [0, 0, 128], sizes = [5, 5, 128], strides = [1, 1, 1]} : vector<5x5x256xf32> to vector<5x5x128xf32>
    %9 = arith.maximumf %7, %8 : vector<5x5x128xf32>
    %c0_4 = arith.constant 0 : index
    %c0_5 = arith.constant 0 : index
    %c0_6 = arith.constant 0 : index
    %c0_7 = arith.constant 0 : index
    %10 = vector.load %arg2[%c0_4, %c0_5, %c0_6, %c0_7] : memref<1x5x5x128xf32, #tpu.memory_space<vmem>>, vector<1x5x5x128xf32>
    %11 = vector.shape_cast %10 : vector<1x5x5x128xf32> to vector<5x5x128xf32>
    %12 = vector.shape_cast %9 : vector<5x5x128xf32> to vector<1x5x5x128xf32>
    tpu.vector_store %arg2[%c0_4, %c0_5, %c0_6, %c0_7], %12 {strides = array<i32>} : memref<1x5x5x128xf32, #tpu.memory_space<vmem>>, vector<1x5x5x128xf32>,
    return
  }
  func.func @transform_0(%arg0: i32) -> (i32, i32, i32, i32, i32) {
    %c0_i32 = arith.constant 0 : i32
    %c0_i32_0 = arith.constant 0 : i32
    %c0_i32_1 = arith.constant 0 : i32
    %c0_i32_2 = arith.constant 0 : i32
    %c0_i32_3 = arith.constant 0 : i32
    return %arg0, %c0_i32, %c0_i32_0, %c0_i32_1, %c0_i32_2 : i32, i32, i32, i32, i32
  }
  func.func @transform_1(%arg0: i32) -> (i32, i32, i32, i32) {
    %c0_i32 = arith.constant 0 : i32
    %c0_i32_0 = arith.constant 0 : i32
    %c0_i32_1 = arith.constant 0 : i32
    %c0_i32_2 = arith.constant 0 : i32
    return %arg0, %c0_i32, %c0_i32_0, %c0_i32_1 : i32, i32, i32, i32
  }
}

module attributes {stable_mosaic.version = 11 : i64} {
  func.func @_mlp3_kernel(%arg0: i32, %arg1: memref<2x400xbf16, #tpu.memory_space<vmem>>, %arg2: memref<400x128xbf16, #tpu.memory_space<vmem>>, %arg3: memref<1x128xf32, #tpu.memory_space<vmem>>, %arg4: memref<128x128xbf16, #tpu.memory_space<vmem>>, %arg5: memref<1x128xf32, #tpu.memory_space<vmem>>, %arg6: memref<128x128xbf16, #tpu.memory_space<vmem>>, %arg7: memref<1x128xf32, #tpu.memory_space<vmem>>, %arg8: memref<2x128xf32, #tpu.memory_space<vmem>>) attributes {dimension_semantics = [#tpu.dimension_semantics<parallel>], iteration_bounds = array<i64: 1>, scalar_prefetch = 0 : i64, scratch_operands = 0 : i64, tpu.core_type = #tpu.core_type<tc>, window_params = [{transform_indices = @transform_0, window_bounds = array<i64: 2, 400>}, {pipeline_mode = #tpu.pipeline_mode<synchronous>, transform_indices = @transform_1, window_bounds = array<i64: 400, 128>}, {pipeline_mode = #tpu.pipeline_mode<synchronous>, transform_indices = @transform_2, window_bounds = array<i64: 1, 128>}, {pipeline_mode = #tpu.pipeline_mode<synchronous>, transform_indices = @transform_3, window_bounds = array<i64: 128, 128>}, {pipeline_mode = #tpu.pipeline_mode<synchronous>, transform_indices = @transform_4, window_bounds = array<i64: 1, 128>}, {pipeline_mode = #tpu.pipeline_mode<synchronous>, transform_indices = @transform_5, window_bounds = array<i64: 128, 128>}, {pipeline_mode = #tpu.pipeline_mode<synchronous>, transform_indices = @transform_6, window_bounds = array<i64: 1, 128>}, {transform_indices = @transform_7, window_bounds = array<i64: 2, 128>}]} {
    %c0 = arith.constant 0 : index
    %c0_0 = arith.constant 0 : index
    %0 = vector.load %arg1[%c0, %c0_0] : memref<2x400xbf16, #tpu.memory_space<vmem>>, vector<2x400xbf16>
    %c0_1 = arith.constant 0 : index
    %c0_2 = arith.constant 0 : index
    %1 = vector.load %arg2[%c0_1, %c0_2] : memref<400x128xbf16, #tpu.memory_space<vmem>>, vector<400x128xbf16>
    %cst = arith.constant dense<0.000000e+00> : vector<2x128xf32>
    %2 = tpu.matmul %0, %1, %cst {dimension_numbers = #tpu.dot_dimension_numbers<[1], [0], [0], [1], [0, 0, 1, 1], [], []>} : vector<2x400xbf16>, vector<400x128xbf16>, vector<2x128xf32> -> vector<2x128xf32>
    %c0_3 = arith.constant 0 : index
    %c0_4 = arith.constant 0 : index
    %3 = vector.load %arg3[%c0_3, %c0_4] : memref<1x128xf32, #tpu.memory_space<vmem>>, vector<1x128xf32>
    %4 = vector.broadcast %3 : vector<1x128xf32> to vector<2x128xf32>
    %5 = arith.addf %2, %4 : vector<2x128xf32>
    %cst_5 = arith.constant 0.000000e+00 : f32
    %6 = vector.broadcast %cst_5 : f32 to vector<2x128xf32>
    %7 = arith.maximumf %5, %6 : vector<2x128xf32>
    %8 = arith.truncf %7 : vector<2x128xf32> to vector<2x128xbf16>
    %c0_6 = arith.constant 0 : index
    %c0_7 = arith.constant 0 : index
    %9 = vector.load %arg4[%c0_6, %c0_7] : memref<128x128xbf16, #tpu.memory_space<vmem>>, vector<128x128xbf16>
    %cst_8 = arith.constant dense<0.000000e+00> : vector<2x128xf32>
    %10 = tpu.matmul %8, %9, %cst_8 {dimension_numbers = #tpu.dot_dimension_numbers<[1], [0], [0], [1], [0, 0, 1, 1], [], []>} : vector<2x128xbf16>, vector<128x128xbf16>, vector<2x128xf32> -> vector<2x128xf32>
    %c0_9 = arith.constant 0 : index
    %c0_10 = arith.constant 0 : index
    %11 = vector.load %arg5[%c0_9, %c0_10] : memref<1x128xf32, #tpu.memory_space<vmem>>, vector<1x128xf32>
    %12 = vector.broadcast %11 : vector<1x128xf32> to vector<2x128xf32>
    %13 = arith.addf %10, %12 : vector<2x128xf32>
    %cst_11 = arith.constant 0.000000e+00 : f32
    %14 = vector.broadcast %cst_11 : f32 to vector<2x128xf32>
    %15 = arith.maximumf %13, %14 : vector<2x128xf32>
    %16 = arith.truncf %15 : vector<2x128xf32> to vector<2x128xbf16>
    %c0_12 = arith.constant 0 : index
    %c0_13 = arith.constant 0 : index
    %17 = vector.load %arg6[%c0_12, %c0_13] : memref<128x128xbf16, #tpu.memory_space<vmem>>, vector<128x128xbf16>
    %cst_14 = arith.constant dense<0.000000e+00> : vector<2x128xf32>
    %18 = tpu.matmul %16, %17, %cst_14 {dimension_numbers = #tpu.dot_dimension_numbers<[1], [0], [0], [1], [0, 0, 1, 1], [], []>} : vector<2x128xbf16>, vector<128x128xbf16>, vector<2x128xf32> -> vector<2x128xf32>
    %c0_15 = arith.constant 0 : index
    %c0_16 = arith.constant 0 : index
    %19 = vector.load %arg7[%c0_15, %c0_16] : memref<1x128xf32, #tpu.memory_space<vmem>>, vector<1x128xf32>
    %20 = vector.broadcast %19 : vector<1x128xf32> to vector<2x128xf32>
    %21 = arith.addf %18, %20 : vector<2x128xf32>
    %c0_17 = arith.constant 0 : index
    %c0_18 = arith.constant 0 : index
    %22 = vector.load %arg8[%c0_17, %c0_18] : memref<2x128xf32, #tpu.memory_space<vmem>>, vector<2x128xf32>
    tpu.vector_store %arg8[%c0_17, %c0_18], %21 {strides = array<i32>} : memref<2x128xf32, #tpu.memory_space<vmem>>, vector<2x128xf32>,
    return
  }
  func.func @transform_0(%arg0: i32) -> (i32, i32) {
    %c0_i32 = arith.constant 0 : i32
    %c0_i32_0 = arith.constant 0 : i32
    return %arg0, %c0_i32 : i32, i32
  }
  func.func @transform_1(%arg0: i32) -> (i32, i32) {
    %c0_i32 = arith.constant 0 : i32
    %c0_i32_0 = arith.constant 0 : i32
    %c0_i32_1 = arith.constant 0 : i32
    return %c0_i32, %c0_i32_0 : i32, i32
  }
  func.func @transform_2(%arg0: i32) -> (i32, i32) {
    %c0_i32 = arith.constant 0 : i32
    %c0_i32_0 = arith.constant 0 : i32
    %c0_i32_1 = arith.constant 0 : i32
    return %c0_i32, %c0_i32_0 : i32, i32
  }
  func.func @transform_3(%arg0: i32) -> (i32, i32) {
    %c0_i32 = arith.constant 0 : i32
    %c0_i32_0 = arith.constant 0 : i32
    %c0_i32_1 = arith.constant 0 : i32
    return %c0_i32, %c0_i32_0 : i32, i32
  }
  func.func @transform_4(%arg0: i32) -> (i32, i32) {
    %c0_i32 = arith.constant 0 : i32
    %c0_i32_0 = arith.constant 0 : i32
    %c0_i32_1 = arith.constant 0 : i32
    return %c0_i32, %c0_i32_0 : i32, i32
  }
  func.func @transform_5(%arg0: i32) -> (i32, i32) {
    %c0_i32 = arith.constant 0 : i32
    %c0_i32_0 = arith.constant 0 : i32
    %c0_i32_1 = arith.constant 0 : i32
    return %c0_i32, %c0_i32_0 : i32, i32
  }
  func.func @transform_6(%arg0: i32) -> (i32, i32) {
    %c0_i32 = arith.constant 0 : i32
    %c0_i32_0 = arith.constant 0 : i32
    %c0_i32_1 = arith.constant 0 : i32
    return %c0_i32, %c0_i32_0 : i32, i32
  }
  func.func @transform_7(%arg0: i32) -> (i32, i32) {
    %c0_i32 = arith.constant 0 : i32
    %c0_i32_0 = arith.constant 0 : i32
    return %arg0, %c0_i32 : i32, i32
  }
}

</mosaic_0001>

<llo_original>
// kernel: net_forward.5
$region0: #{net_forward.5}
  #allocation0 [shape = 'u32[]', space=smem, size = 0x4, offset = 0x4, fixed_abs, tag = 'smem constant byte address 0x4 - core index']
  #allocation1 [shape = 'u32[72,128]{1,0:T(1,128)}', space=vmem, size = 0x9000, scoped, tag = 'internal scratch']
  %s0 = inlined_call_operand.vmem [shape: bf16[1568,75], index: 0, kind: input, shape index: {}]
  %s1 = inlined_call_operand.vmem [shape: bf16[75,128], index: 1, kind: input, shape index: {}]
  %s2 = inlined_call_operand.vmem [shape: f32[1,128], index: 2, kind: input, shape index: {}]
  %s3 = inlined_call_operand.vmem [shape: f32[1568,128], index: 3, kind: output, shape index: {}]
  %s4 = sld [smem:[#allocation0]]
  $region93: #{net_forward.5} parent=0
    _
  %s6 = ssub.s32 1, %s4
  %s7 = scalar_select 0, %s6, %s4
  $region1: #{net_forward.5} parent=0
    #allocation2 [shape = 'u8[524288]{0}', space=vmem, size = 0x80000, scoped, tag = 'output window, operand 0']
    loop: start=0, step=1, limit=6
    $region2: #{net_forward.5} parent=1 // loop_pre_header
      _
    $region3: #{net_forward.5} parent=1 // loop_header
      %s9 = sphi 0, %s13
      %p10 = scmp.ge.s32.totalorder %s9, 6
      %s19 = sphi 0, %s21
      %s22 = sphi 0, %s19
      %s23 = sphi 0, %s22
      %s39 = sphi 0, %s23
      %s43 = sphi 0, %s43
      %s45 = sphi 0, %s43
      %s46 = sphi 0, %s45
      %s60 = sphi 0, %s46
      %s64 = sphi 0, %s64
      %s66 = sphi 0, %s64
      %s67 = sphi 0, %s66
      %s81 = sphi 0, %s67
      %s87 = sphi 0, %s89
      %s90 = sphi 0, %s87
      %s91 = sphi 0, %s90
      %s107 = sphi 0, %s91
    $region4: #{net_forward.5} parent=1 // loop_header_branch
      %12 = sbr.rel (%p10) target = $region8
    $region5: #{net_forward.5} parent=1 // loop_body
      %s14 = ssub.s32 %s9, 1
      %s15 = ssub.s32 %s9, 2
      %s16 = sadd.s32 %s9, 1
      %s17 = ssub.s32 %s9, %s16
      %p18 = scmp.eq.s32.totalorder %s17, 0
      %s20 = sadd.s32 %s19, 1
      %s21 = scalar_select %p18, %s19, %s20
      %p24 = pneg %p18
      %p25 = scmp.eq.s32.totalorder %s9, 3
      %p26 = por %p24, %p25
      %p27 = scmp.ne.s32.totalorder %s19, %s22
      %p28 = scmp.eq.s32.totalorder %s9, 0
      %p29 = por %p27, %p28
      %p30 = scmp.ne.s32.totalorder %s19, %s22
      %p31 = scmp.eq.s32.totalorder %s14, 3
      %p32 = por %p30, %p31
      %p33 = scmp.ne.s32.totalorder %s22, %s23
      %p34 = scmp.eq.s32.totalorder %s14, 0
      %p35 = por %p33, %p34
      %p36 = scmp.ne.s32.totalorder %s22, %s23
      %p37 = scmp.eq.s32.totalorder %s15, 3
      %p38 = por %p36, %p37
      %p40 = scmp.ne.s32.totalorder %s23, %s39
      %p41 = scmp.eq.s32.totalorder %s15, 0
      %p42 = por %p40, %p41
      %s44 = sadd.s32 %s43, 1
      %p47 = scmp.eq.s32.totalorder %s9, 3
      %p48 = scmp.ne.s32.totalorder %s43, %s45
      %p49 = scmp.eq.s32.totalorder %s9, 0
      %p50 = por %p48, %p49
      %p51 = scmp.ne.s32.totalorder %s43, %s45
      %p52 = scmp.eq.s32.totalorder %s14, 3
      %p53 = por %p51, %p52
      %p54 = scmp.ne.s32.totalorder %s45, %s46
      %p55 = scmp.eq.s32.totalorder %s14, 0
      %p56 = por %p54, %p55
      %p57 = scmp.ne.s32.totalorder %s45, %s46
      %p58 = scmp.eq.s32.totalorder %s15, 3
      %p59 = por %p57, %p58
      %p61 = scmp.ne.s32.totalorder %s46, %s60
      %p62 = scmp.eq.s32.totalorder %s15, 0
      %p63 = por %p61, %p62
      %s65 = sadd.s32 %s64, 1
      %p68 = scmp.eq.s32.totalorder %s9, 3
      %p69 = scmp.ne.s32.totalorder %s64, %s66
      %p70 = scmp.eq.s32.totalorder %s9, 0
      %p71 = por %p69, %p70
      %p72 = scmp.ne.s32.totalorder %s64, %s66
      %p73 = scmp.eq.s32.totalorder %s14, 3
      %p74 = por %p72, %p73
      %p75 = scmp.ne.s32.totalorder %s66, %s67
      %p76 = scmp.eq.s32.totalorder %s14, 0
      %p77 = por %p75, %p76
      %p78 = scmp.ne.s32.totalorder %s66, %s67
      %p79 = scmp.eq.s32.totalorder %s15, 3
      %p80 = por %p78, %p79
      %p82 = scmp.ne.s32.totalorder %s67, %s81
      %p83 = scmp.eq.s32.totalorder %s15, 0
      %p84 = por %p82, %p83
      %s85 = ssub.s32 %s9, %s16
      %p86 = scmp.eq.s32.totalorder %s85, 0
      %s88 = sadd.s32 %s87, 1
      %s89 = scalar_select %p86, %s87, %s88
      %p92 = pneg %p86
      %p93 = scmp.eq.s32.totalorder %s9, 3
      %p94 = por %p92, %p93
      %p95 = scmp.ne.s32.totalorder %s87, %s90
      %p96 = scmp.eq.s32.totalorder %s9, 0
      %p97 = por %p95, %p96
      %p98 = scmp.ne.s32.totalorder %s87, %s90
      %p99 = scmp.eq.s32.totalorder %s14, 3
      %p100 = por %p98, %p99
      %p101 = scmp.ne.s32.totalorder %s90, %s91
      %p102 = scmp.eq.s32.totalorder %s14, 0
      %p103 = por %p101, %p102
      %p104 = scmp.ne.s32.totalorder %s90, %s91
      %p105 = scmp.eq.s32.totalorder %s15, 3
      %p106 = por %p104, %p105
      %p108 = scmp.ne.s32.totalorder %s91, %s107
      %p109 = scmp.eq.s32.totalorder %s15, 0
      %p110 = por %p108, %p109
      %p111 = scmp.le.s32.totalorder 1, %s9
      %p112 = scmp.lt.s32.totalorder %s9, 5
      %p113 = pnand %p111, %p112
      %p114 = pneg %p113
      // Predicated region
      $region9: #{net_forward.5} parent=5 // pred_check
        _
      $region10: #{net_forward.5} parent=5 // pred_check_branch
        %116 = sbr.rel (%p113) target = $region12
      $region11: #{net_forward.5} parent=5 // pred_region
        %s117 = ssub.s32 %s9, 1
        // Predicated region
        $region13: #{net_forward.5} parent=11 // pred_check
          %p118 = pneg %p56
        $region14: #{net_forward.5} parent=11 // pred_check_branch
          %120 = sbr.rel (%p118) target = $region16
        $region15: #{net_forward.5} parent=11 // pred_region
          _
        $region16: #{net_forward.5} parent=11 // pred_fallthru
          _
        // Predicated region
        $region17: #{net_forward.5} parent=11 // pred_check
          %p121 = pneg %p77
        $region18: #{net_forward.5} parent=11 // pred_check_branch
          %123 = sbr.rel (%p121) target = $region20
        $region19: #{net_forward.5} parent=11 // pred_region
          _
        $region20: #{net_forward.5} parent=11 // pred_fallthru
          _
      $region12: #{net_forward.5} parent=5 // pred_fallthru
        _
      %p124 = scmp.lt.s32.totalorder %s9, 4
      // Predicated region
      $region21: #{net_forward.5} parent=5 // pred_check
        %p125 = pneg %p124
      $region22: #{net_forward.5} parent=5 // pred_check_branch
        %127 = sbr.rel (%p125) target = $region24
      $region23: #{net_forward.5} parent=5 // pred_region
        // Predicated region
        $region25: #{net_forward.5} parent=23 // pred_check
          %p128 = pneg %p29
        $region26: #{net_forward.5} parent=23 // pred_check_branch
          %130 = sbr.rel (%p128) target = $region28
        $region27: #{net_forward.5} parent=23 // pred_region
          %s131 = smul.u32 64, %s9
          %s132 = ssub.s32 196, %s131
          %p133 = scmp.lt.s32.totalorder %s132, 64
          %s134 = scalar_select %p133, %s132, 64
          %s135 = smul.u32 4, %s134
          %p136 = scmp.lt.s32.totalorder %s131, 195
          %s137 = scalar_select %p136, %s131, 195
          %s138 = smul.addr %s137, 4
          %s139 = scalar_lea.vmem %s0, %s138
          %s140 = smul.u32 64, %s9
          %s141 = ssub.s32 196, %s140
          %p142 = scmp.lt.s32.totalorder %s141, 64
          %s143 = scalar_select %p142, %s141, 64
          %s144 = smul.u32 4, %s143
        $region28: #{net_forward.5} parent=23 // pred_fallthru
          _
      $region24: #{net_forward.5} parent=5 // pred_fallthru
        _
      %p145 = scmp.le.s32.totalorder 1, %s9
      %p146 = scmp.lt.s32.totalorder %s9, 5
      %p147 = pnand %p145, %p146
      %p148 = pneg %p147
      // Predicated region
      $region29: #{net_forward.5} parent=5 // pred_check
        _
      $region30: #{net_forward.5} parent=5 // pred_check_branch
        %150 = sbr.rel (%p147) target = $region32
      $region31: #{net_forward.5} parent=5 // pred_region
        %s151 = ssub.s32 %s9, 1
        %s152 = smul.u32 64, %s14
        %s153 = ssub.s32 196, %s152
        %p154 = scmp.lt.s32.totalorder %s153, 64
        %s155 = scalar_select %p154, %s153, 64
        %s156 = smul.u32 4, %s155
        %p157 = scmp.lt.s32.totalorder %s152, 195
        %s158 = scalar_select %p157, %s152, 195
        %s159 = smul.addr %s158, 4
        %s160 = scalar_lea.vmem %s0, %s159
        %p161 = pneg %p35
        %p162 = pneg %p32
        %p163 = pneg %p56
        %p164 = pneg %p53
        %p165 = pneg %p77
        %p166 = pneg %p74
        %p167 = pneg %p103
        %p168 = pneg %p100
        %s169 = sand.u32 %s90, 1
        %s170 = sand.u32 %s90, 1
        %s171 = smul.addr %s170, 512
        %s172 = scalar_lea.vmem [#allocation2], %s171
        %s173 = smul.u32 64, %s14
        %s174 = ssub.s32 196, %s173
        %p175 = scmp.lt.s32.totalorder %s174, 64
        %s176 = scalar_select %p175, %s174, 64
        %s177 = smul.u32 4, %s176
        %p178 = scmp.lt.s32.totalorder %s173, 195
        %s179 = scalar_select %p178, %s173, 195
        %s180 = smul.addr %s179, 4
        %s181 = scalar_lea.vmem %s0, %s180
        %s182 = smul.u32 64, %s14
        %s183 = ssub.s32 196, %s182
        %p184 = scmp.lt.s32.totalorder %s183, 64
        %s185 = scalar_select %p184, %s183, 64
        %s186 = smul.u32 4, %s185
        %s187 = smul.u32 64, %s14
        %s188 = ssub.s32 196, %s187
        %p189 = scmp.lt.s32.totalorder %s188, 64
        %s190 = scalar_select %p189, %s188, 64
        %s191 = smul.u32 8, %s190
        %v193 = vld [vmem:[%s181] sm:$0xf]
        %v194 = vld [vmem:[%s181 + $0x4] sm:$0xf]
        %v195 = vld [vmem:[%s181 + $0x8] sm:$0xf]
        %v196 = vld [vmem:[%s181 + $0xc] sm:$0xf]
        %v197 = vld [vmem:[%s181 + $0x10] sm:$0xf]
        %v198 = vld [vmem:[%s181 + $0x14] sm:$0xf]
        %v199 = vld [vmem:[%s181 + $0x18] sm:$0xf]
        %v200 = vld [vmem:[%s181 + $0x1c] sm:$0xf]
        %v201 = vld [vmem:[%s181 + $0x20] sm:$0xf]
        %v202 = vld [vmem:[%s181 + $0x24] sm:$0xf]
        %v203 = vld [vmem:[%s181 + $0x28] sm:$0xf]
        %v204 = vld [vmem:[%s181 + $0x2c] sm:$0xf]
        %v205 = vld [vmem:[%s181 + $0x30] sm:$0xf]
        %v206 = vld [vmem:[%s181 + $0x34] sm:$0xf]
        %v207 = vld [vmem:[%s181 + $0x38] sm:$0xf]
        %v208 = vld [vmem:[%s181 + $0x3c] sm:$0xf]
        %v209 = vld [vmem:[%s181 + $0x40] sm:$0xf]
        %v210 = vld [vmem:[%s181 + $0x44] sm:$0xf]
        %v211 = vld [vmem:[%s181 + $0x48] sm:$0xf]
        %v212 = vld [vmem:[%s181 + $0x4c] sm:$0xf]
        %v213 = vld [vmem:[%s181 + $0x50] sm:$0xf]
        %v214 = vld [vmem:[%s181 + $0x54] sm:$0xf]
        %v215 = vld [vmem:[%s181 + $0x58] sm:$0xf]
        %v216 = vld [vmem:[%s181 + $0x5c] sm:$0xf]
        %v217 = vld [vmem:[%s181 + $0x60] sm:$0xf]
        %v218 = vld [vmem:[%s181 + $0x64] sm:$0xf]
        %v219 = vld [vmem:[%s181 + $0x68] sm:$0xf]
        %v220 = vld [vmem:[%s181 + $0x6c] sm:$0xf]
        %v221 = vld [vmem:[%s181 + $0x70] sm:$0xf]
        %v222 = vld [vmem:[%s181 + $0x74] sm:$0xf]
        %v223 = vld [vmem:[%s181 + $0x78] sm:$0xf]
        %v224 = vld [vmem:[%s181 + $0x7c] sm:$0xf]
        %v225 = vld [vmem:[%s181 + $0x80] sm:$0xf]
        %v226 = vld [vmem:[%s181 + $0x84] sm:$0xf]
        %v227 = vld [vmem:[%s181 + $0x88] sm:$0xf]
        %v228 = vld [vmem:[%s181 + $0x8c] sm:$0xf]
        %v229 = vld [vmem:[%s181 + $0x90] sm:$0xf]
        %v230 = vld [vmem:[%s181 + $0x94] sm:$0xf]
        %v231 = vld [vmem:[%s181 + $0x98] sm:$0xf]
        %v232 = vld [vmem:[%s181 + $0x9c] sm:$0xf]
        %v233 = vld [vmem:[%s181 + $0xa0] sm:$0xf]
        %v234 = vld [vmem:[%s181 + $0xa4] sm:$0xf]
        %v235 = vld [vmem:[%s181 + $0xa8] sm:$0xf]
        %v236 = vld [vmem:[%s181 + $0xac] sm:$0xf]
        %v237 = vld [vmem:[%s181 + $0xb0] sm:$0xf]
        %v238 = vld [vmem:[%s181 + $0xb4] sm:$0xf]
        %v239 = vld [vmem:[%s181 + $0xb8] sm:$0xf]
        %v240 = vld [vmem:[%s181 + $0xbc] sm:$0xf]
        %v241 = vld [vmem:[%s181 + $0xc0] sm:$0xf]
        %v242 = vld [vmem:[%s181 + $0xc4] sm:$0xf]
        %v243 = vld [vmem:[%s181 + $0xc8] sm:$0xf]
        %v244 = vld [vmem:[%s181 + $0xcc] sm:$0xf]
        %v245 = vld [vmem:[%s181 + $0xd0] sm:$0xf]
        %v246 = vld [vmem:[%s181 + $0xd4] sm:$0xf]
        %v247 = vld [vmem:[%s181 + $0xd8] sm:$0xf]
        %v248 = vld [vmem:[%s181 + $0xdc] sm:$0xf]
        %v249 = vld [vmem:[%s181 + $0xe0] sm:$0xf]
        %v250 = vld [vmem:[%s181 + $0xe4] sm:$0xf]
        %v251 = vld [vmem:[%s181 + $0xe8] sm:$0xf]
        %v252 = vld [vmem:[%s181 + $0xec] sm:$0xf]
        %v253 = vld [vmem:[%s181 + $0xf0] sm:$0xf]
        %v254 = vld [vmem:[%s181 + $0xf4] sm:$0xf]
        %v255 = vld [vmem:[%s181 + $0xf8] sm:$0xf]
        %v256 = vld [vmem:[%s181 + $0xfc] sm:$0xf]
        %v257 = vld [vmem:[%s1] sm:$0xf]
        %v258 = vld [vmem:[%s1 + $0x4] sm:$0xf]
        %v259 = vld [vmem:[%s1 + $0x8] sm:$0xf]
        %v260 = vld [vmem:[%s1 + $0xc] sm:$0xf]
        %v261 = vld [vmem:[%s1 + $0x10] sm:$0xf]
        %v262 = vld [vmem:[%s1 + $0x14] sm:$0xf]
        %v263 = vld [vmem:[%s1 + $0x18] sm:$0xf]
        %v264 = vld [vmem:[%s1 + $0x1c] sm:$0xf]
        %v265 = vld [vmem:[%s1 + $0x20] sm:$0xf]
        %v266 = vld [vmem:[%s1 + $0x24] sm:$0x3]
        %v267 = vld [vmem:[%s2] sm:$0x1]
        %v269 = vperm.slane %v267, 0
        %v335 = vunpack.c.l.b16 %v193
        %v336 = vunpack.c.l.b16 %v194
        %v337 = vunpack.c.l.b16 %v195
        %v338 = vunpack.c.l.b16 %v196
        %v339 = vunpack.c.l.b16 %v197
        %v340 = vunpack.c.l.b16 %v198
        %v341 = vunpack.c.l.b16 %v199
        %v342 = vunpack.c.l.b16 %v200
        %v343 = vunpack.c.l.b16 %v201
        %v344 = vunpack.c.l.b16 %v202
        %v345 = vunpack.c.l.b16 %v203
        %v346 = vunpack.c.l.b16 %v204
        %v347 = vunpack.c.l.b16 %v205
        %v348 = vunpack.c.l.b16 %v206
        %v349 = vunpack.c.l.b16 %v207
        %v350 = vunpack.c.l.b16 %v208
        %v351 = vunpack.c.l.b16 %v209
        %v352 = vunpack.c.l.b16 %v210
        %v353 = vunpack.c.l.b16 %v211
        %v354 = vunpack.c.l.b16 %v212
        %v355 = vunpack.c.l.b16 %v213
        %v356 = vunpack.c.l.b16 %v214
        %v357 = vunpack.c.l.b16 %v215
        %v358 = vunpack.c.l.b16 %v216
        %v359 = vunpack.c.l.b16 %v217
        %v360 = vunpack.c.l.b16 %v218
        %v361 = vunpack.c.l.b16 %v219
        %v362 = vunpack.c.l.b16 %v220
        %v363 = vunpack.c.l.b16 %v221
        %v364 = vunpack.c.l.b16 %v222
        %v365 = vunpack.c.l.b16 %v223
        %v366 = vunpack.c.l.b16 %v224
        %v367 = vunpack.c.l.b16 %v225
        %v368 = vunpack.c.l.b16 %v226
        %v369 = vunpack.c.l.b16 %v227
        %v370 = vunpack.c.l.b16 %v228
        %v371 = vunpack.c.l.b16 %v229
        %v372 = vunpack.c.l.b16 %v230
        %v373 = vunpack.c.l.b16 %v231
        %v374 = vunpack.c.l.b16 %v232
        %v375 = vunpack.c.l.b16 %v233
        %v376 = vunpack.c.l.b16 %v234
        %v377 = vunpack.c.l.b16 %v235
        %v378 = vunpack.c.l.b16 %v236
        %v379 = vunpack.c.l.b16 %v237
        %v380 = vunpack.c.l.b16 %v238
        %v381 = vunpack.c.l.b16 %v239
        %v382 = vunpack.c.l.b16 %v240
        %v383 = vunpack.c.l.b16 %v241
        %v384 = vunpack.c.l.b16 %v242
        %v385 = vunpack.c.l.b16 %v243
        %v386 = vunpack.c.l.b16 %v244
        %v387 = vunpack.c.l.b16 %v245
        %v388 = vunpack.c.l.b16 %v246
        %v389 = vunpack.c.l.b16 %v247
        %v390 = vunpack.c.l.b16 %v248
        %v391 = vunpack.c.l.b16 %v249
        %v392 = vunpack.c.l.b16 %v250
        %v393 = vunpack.c.l.b16 %v251
        %v394 = vunpack.c.l.b16 %v252
        %v395 = vunpack.c.l.b16 %v253
        %v396 = vunpack.c.l.b16 %v254
        %v397 = vunpack.c.l.b16 %v255
        %v398 = vunpack.c.l.b16 %v256
        %v399 = vpack.c.b16 %v336, %v335
        %v400 = vpack.c.b16 %v338, %v337
        %v401 = vpack.c.b16 %v340, %v339
        %v402 = vpack.c.b16 %v342, %v341
        %v403 = vpack.c.b16 %v344, %v343
        %v404 = vpack.c.b16 %v346, %v345
        %v405 = vpack.c.b16 %v348, %v347
        %v406 = vpack.c.b16 %v350, %v349
        %v407 = vpack.c.b16 %v352, %v351
        %v408 = vpack.c.b16 %v354, %v353
        %v409 = vpack.c.b16 %v356, %v355
        %v410 = vpack.c.b16 %v358, %v357
        %v411 = vpack.c.b16 %v360, %v359
        %v412 = vpack.c.b16 %v362, %v361
        %v413 = vpack.c.b16 %v364, %v363
        %v414 = vpack.c.b16 %v366, %v365
        %v415 = vpack.c.b16 %v368, %v367
        %v416 = vpack.c.b16 %v370, %v369
        %v417 = vpack.c.b16 %v372, %v371
        %v418 = vpack.c.b16 %v374, %v373
        %v419 = vpack.c.b16 %v376, %v375
        %v420 = vpack.c.b16 %v378, %v377
        %v421 = vpack.c.b16 %v380, %v379
        %v422 = vpack.c.b16 %v382, %v381
        %v423 = vpack.c.b16 %v384, %v383
        %v424 = vpack.c.b16 %v386, %v385
        %v425 = vpack.c.b16 %v388, %v387
        %v426 = vpack.c.b16 %v390, %v389
        %v427 = vpack.c.b16 %v392, %v391
        %v428 = vpack.c.b16 %v394, %v393
        %v429 = vpack.c.b16 %v396, %v395
        %v430 = vpack.c.b16 %v398, %v397
        %v441 = vunpack.c.l.b16 %v257
        %v442 = vunpack.c.l.b16 %v258
        %v443 = vunpack.c.l.b16 %v259
        %v444 = vunpack.c.l.b16 %v260
        %v445 = vunpack.c.l.b16 %v261
        %v446 = vunpack.c.l.b16 %v262
        %v447 = vunpack.c.l.b16 %v263
        %v448 = vunpack.c.l.b16 %v264
        %v449 = vunpack.c.l.b16 %v265
        %v450 = vunpack.c.l.b16 %v266
        %v451 = vpack.c.b16 %v442, %v441
        %v452 = vpack.c.b16 %v444, %v443
        %v453 = vpack.c.b16 %v446, %v445
        %v454 = vpack.c.b16 %v448, %v447
        %v455 = vpack.c.b16 %v450, %v449
        %vm460 = vcmask 613376
        %v462 = vsel %vm460, %v399, 0
        %v465 = vsel %vm460, %v400, 0
        %v468 = vsel %vm460, %v401, 0
        %v471 = vsel %vm460, %v402, 0
        %v474 = vsel %vm460, %v403, 0
        %v477 = vsel %vm460, %v404, 0
        %v480 = vsel %vm460, %v405, 0
        %v483 = vsel %vm460, %v406, 0
        %v486 = vsel %vm460, %v407, 0
        %v489 = vsel %vm460, %v408, 0
        %v492 = vsel %vm460, %v409, 0
        %v495 = vsel %vm460, %v410, 0
        %v498 = vsel %vm460, %v411, 0
        %v501 = vsel %vm460, %v412, 0
        %v504 = vsel %vm460, %v413, 0
        %v507 = vsel %vm460, %v414, 0
        %v510 = vsel %vm460, %v415, 0
        %v513 = vsel %vm460, %v416, 0
        %v516 = vsel %vm460, %v417, 0
        %v519 = vsel %vm460, %v418, 0
        %v522 = vsel %vm460, %v419, 0
        %v525 = vsel %vm460, %v420, 0
        %v528 = vsel %vm460, %v421, 0
        %v531 = vsel %vm460, %v422, 0
        %v534 = vsel %vm460, %v423, 0
        %v537 = vsel %vm460, %v424, 0
        %v540 = vsel %vm460, %v425, 0
        %v543 = vsel %vm460, %v426, 0
        %v546 = vsel %vm460, %v427, 0
        %v549 = vsel %vm460, %v428, 0
        %v552 = vsel %vm460, %v429, 0
        %v555 = vsel %vm460, %v430, 0
        %vm557 = vcmask 1044480
        %vm558 = vcmask 1045504
        %v559 = vsel %vm557, 4294967295, 65535
        %v560 = vsel %vm558, %v559, 0
        %v562 = vand.u32 %v455, %v560
        %564 = vmatpush.bf16.msra.mxu0 0
        %565 = vmatpush.bf16.msra.mxu0 0
        %566 = vmatpush.bf16.msra.mxu0 0
        %567 = vmatpush.bf16.msra.mxu0 %v562
        %568 = vmatpush.bf16.msra.mxu0 %v454
        %569 = vmatpush.bf16.msra.mxu0 %v453
        %570 = vmatpush.bf16.msra.mxu0 %v452
        %571 = vmatpush.bf16.msra.mxu0 %v451
        %572 = vmatmul.bf16.gmra.mxu0 %v462
        %v573 = vpop.f32.mrf.mxu0
        %v574 = vadd.f32 %v269, %v573
        %v575 = vpop.f32.mrf.mxu0
        %v576 = vadd.f32 %v269, %v575
        %577 = vmatmul.bf16.gmra.mxu0 %v465
        %v578 = vpop.f32.mrf.mxu0
        %v579 = vadd.f32 %v269, %v578
        %v580 = vpop.f32.mrf.mxu0
        %v581 = vadd.f32 %v269, %v580
        %582 = vmatmul.bf16.gmra.mxu0 %v468
        %v583 = vpop.f32.mrf.mxu0
        %v584 = vadd.f32 %v269, %v583
        %v585 = vpop.f32.mrf.mxu0
        %v586 = vadd.f32 %v269, %v585
        %587 = vmatmul.bf16.gmra.mxu0 %v471
        %v588 = vpop.f32.mrf.mxu0
        %v589 = vadd.f32 %v269, %v588
        %v590 = vpop.f32.mrf.mxu0
        %v591 = vadd.f32 %v269, %v590
        %592 = vmatmul.bf16.gmra.mxu0 %v474
        %v593 = vpop.f32.mrf.mxu0
        %v594 = vadd.f32 %v269, %v593
        %v595 = vpop.f32.mrf.mxu0
        %v596 = vadd.f32 %v269, %v595
        %597 = vmatmul.bf16.gmra.mxu0 %v477
        %v598 = vpop.f32.mrf.mxu0
        %v599 = vadd.f32 %v269, %v598
        %v600 = vpop.f32.mrf.mxu0
        %v601 = vadd.f32 %v269, %v600
        %602 = vmatmul.bf16.gmra.mxu0 %v480
        %v603 = vpop.f32.mrf.mxu0
        %v604 = vadd.f32 %v269, %v603
        %v605 = vpop.f32.mrf.mxu0
        %v606 = vadd.f32 %v269, %v605
        %607 = vmatmul.bf16.gmra.mxu0 %v483
        %v608 = vpop.f32.mrf.mxu0
        %v609 = vadd.f32 %v269, %v608
        %v610 = vpop.f32.mrf.mxu0
        %v611 = vadd.f32 %v269, %v610
        %612 = vmatmul.bf16.gmra.mxu0 %v486
        %v613 = vpop.f32.mrf.mxu0
        %v614 = vadd.f32 %v269, %v613
        %v615 = vpop.f32.mrf.mxu0
        %v616 = vadd.f32 %v269, %v615
        %617 = vmatmul.bf16.gmra.mxu0 %v489
        %v618 = vpop.f32.mrf.mxu0
        %v619 = vadd.f32 %v269, %v618
        %v620 = vpop.f32.mrf.mxu0
        %v621 = vadd.f32 %v269, %v620
        %622 = vmatmul.bf16.gmra.mxu0 %v492
        %v623 = vpop.f32.mrf.mxu0
        %v624 = vadd.f32 %v269, %v623
        %v625 = vpop.f32.mrf.mxu0
        %v626 = vadd.f32 %v269, %v625
        %627 = vmatmul.bf16.gmra.mxu0 %v495
        %v628 = vpop.f32.mrf.mxu0
        %v629 = vadd.f32 %v269, %v628
        %v630 = vpop.f32.mrf.mxu0
        %v631 = vadd.f32 %v269, %v630
        %632 = vmatmul.bf16.gmra.mxu0 %v498
        %v633 = vpop.f32.mrf.mxu0
        %v634 = vadd.f32 %v269, %v633
        %v635 = vpop.f32.mrf.mxu0
        %v636 = vadd.f32 %v269, %v635
        %637 = vmatmul.bf16.gmra.mxu0 %v501
        %v638 = vpop.f32.mrf.mxu0
        %v639 = vadd.f32 %v269, %v638
        %v640 = vpop.f32.mrf.mxu0
        %v641 = vadd.f32 %v269, %v640
        %642 = vmatmul.bf16.gmra.mxu0 %v504
        %v643 = vpop.f32.mrf.mxu0
        %v644 = vadd.f32 %v269, %v643
        %v645 = vpop.f32.mrf.mxu0
        %v646 = vadd.f32 %v269, %v645
        %647 = vmatmul.bf16.gmra.mxu0 %v507
        %v648 = vpop.f32.mrf.mxu0
        %v649 = vadd.f32 %v269, %v648
        %v650 = vpop.f32.mrf.mxu0
        %v651 = vadd.f32 %v269, %v650
        %652 = vmatmul.bf16.gmra.mxu0 %v510
        %v653 = vpop.f32.mrf.mxu0
        %v654 = vadd.f32 %v269, %v653
        %v655 = vpop.f32.mrf.mxu0
        %v656 = vadd.f32 %v269, %v655
        %657 = vmatmul.bf16.gmra.mxu0 %v513
        %v658 = vpop.f32.mrf.mxu0
        %v659 = vadd.f32 %v269, %v658
        %v660 = vpop.f32.mrf.mxu0
        %v661 = vadd.f32 %v269, %v660
        %662 = vmatmul.bf16.gmra.mxu0 %v516
        %v663 = vpop.f32.mrf.mxu0
        %v664 = vadd.f32 %v269, %v663
        %v665 = vpop.f32.mrf.mxu0
        %v666 = vadd.f32 %v269, %v665
        %667 = vmatmul.bf16.gmra.mxu0 %v519
        %v668 = vpop.f32.mrf.mxu0
        %v669 = vadd.f32 %v269, %v668
        %v670 = vpop.f32.mrf.mxu0
        %v671 = vadd.f32 %v269, %v670
        %672 = vmatmul.bf16.gmra.mxu0 %v522
        %v673 = vpop.f32.mrf.mxu0
        %v674 = vadd.f32 %v269, %v673
        %v675 = vpop.f32.mrf.mxu0
        %v676 = vadd.f32 %v269, %v675
        %677 = vmatmul.bf16.gmra.mxu0 %v525
        %v678 = vpop.f32.mrf.mxu0
        %v679 = vadd.f32 %v269, %v678
        %v680 = vpop.f32.mrf.mxu0
        %v681 = vadd.f32 %v269, %v680
        %682 = vmatmul.bf16.gmra.mxu0 %v528
        %v683 = vpop.f32.mrf.mxu0
        %v684 = vadd.f32 %v269, %v683
        %v685 = vpop.f32.mrf.mxu0
        %v686 = vadd.f32 %v269, %v685
        %687 = vmatmul.bf16.gmra.mxu0 %v531
        %v688 = vpop.f32.mrf.mxu0
        %v689 = vadd.f32 %v269, %v688
        %v690 = vpop.f32.mrf.mxu0
        %v691 = vadd.f32 %v269, %v690
        %692 = vmatmul.bf16.gmra.mxu0 %v534
        %v693 = vpop.f32.mrf.mxu0
        %v694 = vadd.f32 %v269, %v693
        %v695 = vpop.f32.mrf.mxu0
        %v696 = vadd.f32 %v269, %v695
        %697 = vmatmul.bf16.gmra.mxu0 %v537
        %v698 = vpop.f32.mrf.mxu0
        %v699 = vadd.f32 %v269, %v698
        %v700 = vpop.f32.mrf.mxu0
        %v701 = vadd.f32 %v269, %v700
        %702 = vmatmul.bf16.gmra.mxu0 %v540
        %v703 = vpop.f32.mrf.mxu0
        %v704 = vadd.f32 %v269, %v703
        %v705 = vpop.f32.mrf.mxu0
        %v706 = vadd.f32 %v269, %v705
        %707 = vmatmul.bf16.gmra.mxu0 %v543
        %v708 = vpop.f32.mrf.mxu0
        %v709 = vadd.f32 %v269, %v708
        %v710 = vpop.f32.mrf.mxu0
        %v711 = vadd.f32 %v269, %v710
        %712 = vmatmul.bf16.gmra.mxu0 %v546
        %v713 = vpop.f32.mrf.mxu0
        %v714 = vadd.f32 %v269, %v713
        %v715 = vpop.f32.mrf.mxu0
        %v716 = vadd.f32 %v269, %v715
        %717 = vmatmul.bf16.gmra.mxu0 %v549
        %v718 = vpop.f32.mrf.mxu0
        %v719 = vadd.f32 %v269, %v718
        %v720 = vpop.f32.mrf.mxu0
        %v721 = vadd.f32 %v269, %v720
        %722 = vmatmul.bf16.gmra.mxu0 %v552
        %v723 = vpop.f32.mrf.mxu0
        %v724 = vadd.f32 %v269, %v723
        %v725 = vpop.f32.mrf.mxu0
        %v726 = vadd.f32 %v269, %v725
        %727 = vmatmul.bf16.gmra.mxu0 %v555
        %v728 = vpop.f32.mrf.mxu0
        %v729 = vadd.f32 %v269, %v728
        %v730 = vpop.f32.mrf.mxu0
        %v731 = vadd.f32 %v269, %v730
        %732 = vdwg.mxu0
        %v733 = vmax.f32 %v574, 0.0
        %v734 = vmax.f32 %v576, 0.0
        %v735 = vmax.f32 %v579, 0.0
        %v736 = vmax.f32 %v581, 0.0
        %v737 = vmax.f32 %v584, 0.0
        %v738 = vmax.f32 %v586, 0.0
        %v739 = vmax.f32 %v589, 0.0
        %v740 = vmax.f32 %v591, 0.0
        %v741 = vmax.f32 %v594, 0.0
        %v742 = vmax.f32 %v596, 0.0
        %v743 = vmax.f32 %v599, 0.0
        %v744 = vmax.f32 %v601, 0.0
        %v745 = vmax.f32 %v604, 0.0
        %v746 = vmax.f32 %v606, 0.0
        %v747 = vmax.f32 %v609, 0.0
        %v748 = vmax.f32 %v611, 0.0
        %v749 = vmax.f32 %v614, 0.0
        %v750 = vmax.f32 %v616, 0.0
        %v751 = vmax.f32 %v619, 0.0
        %v752 = vmax.f32 %v621, 0.0
        %v753 = vmax.f32 %v624, 0.0
        %v754 = vmax.f32 %v626, 0.0
        %v755 = vmax.f32 %v629, 0.0
        %v756 = vmax.f32 %v631, 0.0
        %v757 = vmax.f32 %v634, 0.0
        %v758 = vmax.f32 %v636, 0.0
        %v759 = vmax.f32 %v639, 0.0
        %v760 = vmax.f32 %v641, 0.0
        %v761 = vmax.f32 %v644, 0.0
        %v762 = vmax.f32 %v646, 0.0
        %v763 = vmax.f32 %v649, 0.0
        %v764 = vmax.f32 %v651, 0.0
        %v765 = vmax.f32 %v654, 0.0
        %v766 = vmax.f32 %v656, 0.0
        %v767 = vmax.f32 %v659, 0.0
        %v768 = vmax.f32 %v661, 0.0
        %v769 = vmax.f32 %v664, 0.0
        %v770 = vmax.f32 %v666, 0.0
        %v771 = vmax.f32 %v669, 0.0
        %v772 = vmax.f32 %v671, 0.0
        %v773 = vmax.f32 %v674, 0.0
        %v774 = vmax.f32 %v676, 0.0
        %v775 = vmax.f32 %v679, 0.0
        %v776 = vmax.f32 %v681, 0.0
        %v777 = vmax.f32 %v684, 0.0
        %v778 = vmax.f32 %v686, 0.0
        %v779 = vmax.f32 %v689, 0.0
        %v780 = vmax.f32 %v691, 0.0
        %v781 = vmax.f32 %v694, 0.0
        %v782 = vmax.f32 %v696, 0.0
        %v783 = vmax.f32 %v699, 0.0
        %v784 = vmax.f32 %v701, 0.0
        %v785 = vmax.f32 %v704, 0.0
        %v786 = vmax.f32 %v706, 0.0
        %v787 = vmax.f32 %v709, 0.0
        %v788 = vmax.f32 %v711, 0.0
        %v789 = vmax.f32 %v714, 0.0
        %v790 = vmax.f32 %v716, 0.0
        %v791 = vmax.f32 %v719, 0.0
        %v792 = vmax.f32 %v721, 0.0
        %v793 = vmax.f32 %v724, 0.0
        %v794 = vmax.f32 %v726, 0.0
        %v795 = vmax.f32 %v729, 0.0
        %v796 = vmax.f32 %v731, 0.0
        %797 = vst [vmem:[%s172] sm:$0xff] %v733
        %798 = vst [vmem:[%s172 + $0x8] sm:$0xff] %v734
        %799 = vst [vmem:[%s172 + $0x10] sm:$0xff] %v735
        %800 = vst [vmem:[%s172 + $0x18] sm:$0xff] %v736
        %801 = vst [vmem:[%s172 + $0x20] sm:$0xff] %v737
        %802 = vst [vmem:[%s172 + $0x28] sm:$0xff] %v738
        %803 = vst [vmem:[%s172 + $0x30] sm:$0xff] %v739
        %804 = vst [vmem:[%s172 + $0x38] sm:$0xff] %v740
        %805 = vst [vmem:[%s172 + $0x40] sm:$0xff] %v741
        %806 = vst [vmem:[%s172 + $0x48] sm:$0xff] %v742
        %807 = vst [vmem:[%s172 + $0x50] sm:$0xff] %v743
        %808 = vst [vmem:[%s172 + $0x58] sm:$0xff] %v744
        %809 = vst [vmem:[%s172 + $0x60] sm:$0xff] %v745
        %810 = vst [vmem:[%s172 + $0x68] sm:$0xff] %v746
        %811 = vst [vmem:[%s172 + $0x70] sm:$0xff] %v747
        %812 = vst [vmem:[%s172 + $0x78] sm:$0xff] %v748
        %813 = vst [vmem:[%s172 + $0x80] sm:$0xff] %v749
        %814 = vst [vmem:[%s172 + $0x88] sm:$0xff] %v750
        %815 = vst [vmem:[%s172 + $0x90] sm:$0xff] %v751
        %816 = vst [vmem:[%s172 + $0x98] sm:$0xff] %v752
        %817 = vst [vmem:[%s172 + $0xa0] sm:$0xff] %v753
        %818 = vst [vmem:[%s172 + $0xa8] sm:$0xff] %v754
        %819 = vst [vmem:[%s172 + $0xb0] sm:$0xff] %v755
        %820 = vst [vmem:[%s172 + $0xb8] sm:$0xff] %v756
        %821 = vst [vmem:[%s172 + $0xc0] sm:$0xff] %v757
        %822 = vst [vmem:[%s172 + $0xc8] sm:$0xff] %v758
        %823 = vst [vmem:[%s172 + $0xd0] sm:$0xff] %v759
        %824 = vst [vmem:[%s172 + $0xd8] sm:$0xff] %v760
        %825 = vst [vmem:[%s172 + $0xe0] sm:$0xff] %v761
        %826 = vst [vmem:[%s172 + $0xe8] sm:$0xff] %v762
        %827 = vst [vmem:[%s172 + $0xf0] sm:$0xff] %v763
        %828 = vst [vmem:[%s172 + $0xf8] sm:$0xff] %v764
        %829 = vst [vmem:[%s172 + $0x100] sm:$0xff] %v765
        %830 = vst [vmem:[%s172 + $0x108] sm:$0xff] %v766
        %831 = vst [vmem:[%s172 + $0x110] sm:$0xff] %v767
        %832 = vst [vmem:[%s172 + $0x118] sm:$0xff] %v768
        %833 = vst [vmem:[%s172 + $0x120] sm:$0xff] %v769
        %834 = vst [vmem:[%s172 + $0x128] sm:$0xff] %v770
        %835 = vst [vmem:[%s172 + $0x130] sm:$0xff] %v771
        %836 = vst [vmem:[%s172 + $0x138] sm:$0xff] %v772
        %837 = vst [vmem:[%s172 + $0x140] sm:$0xff] %v773
        %838 = vst [vmem:[%s172 + $0x148] sm:$0xff] %v774
        %839 = vst [vmem:[%s172 + $0x150] sm:$0xff] %v775
        %840 = vst [vmem:[%s172 + $0x158] sm:$0xff] %v776
        %841 = vst [vmem:[%s172 + $0x160] sm:$0xff] %v777
        %842 = vst [vmem:[%s172 + $0x168] sm:$0xff] %v778
        %843 = vst [vmem:[%s172 + $0x170] sm:$0xff] %v779
        %844 = vst [vmem:[%s172 + $0x178] sm:$0xff] %v780
        %845 = vst [vmem:[%s172 + $0x180] sm:$0xff] %v781
        %846 = vst [vmem:[%s172 + $0x188] sm:$0xff] %v782
        %847 = vst [vmem:[%s172 + $0x190] sm:$0xff] %v783
        %848 = vst [vmem:[%s172 + $0x198] sm:$0xff] %v784
        %849 = vst [vmem:[%s172 + $0x1a0] sm:$0xff] %v785
        %850 = vst [vmem:[%s172 + $0x1a8] sm:$0xff] %v786
        %851 = vst [vmem:[%s172 + $0x1b0] sm:$0xff] %v787
        %852 = vst [vmem:[%s172 + $0x1b8] sm:$0xff] %v788
        %853 = vst [vmem:[%s172 + $0x1c0] sm:$0xff] %v789
        %854 = vst [vmem:[%s172 + $0x1c8] sm:$0xff] %v790
        %855 = vst [vmem:[%s172 + $0x1d0] sm:$0xff] %v791
        %856 = vst [vmem:[%s172 + $0x1d8] sm:$0xff] %v792
        %857 = vst [vmem:[%s172 + $0x1e0] sm:$0xff] %v793
        %858 = vst [vmem:[%s172 + $0x1e8] sm:$0xff] %v794
        %859 = vst [vmem:[%s172 + $0x1f0] sm:$0xff] %v795
        %860 = vst [vmem:[%s172 + $0x1f8] sm:$0xff] %v796
        %s861 = sand.u32 %s90, 1
        %s862 = sand.u32 %s90, 1
        %s863 = smul.addr %s862, 512
        %s864 = scalar_lea.vmem [#allocation2], %s863
        // Predicated region
        $region33: #{net_forward.5} parent=31 // pred_check
          %p865 = pneg %p100
        $region34: #{net_forward.5} parent=31 // pred_check_branch
          %867 = sbr.rel (%p865) target = $region36
        $region35: #{net_forward.5} parent=31 // pred_region
          %s868 = smul.u32 64, %s14
          %s869 = ssub.s32 196, %s868
          %p870 = scmp.lt.s32.totalorder %s869, 64
          %s871 = scalar_select %p870, %s869, 64
          %s872 = smul.u32 8, %s871
          %p873 = scmp.ne.s32.totalorder 0, %s872
          %s874 = smul.addr %s868, 8
          %s875 = scalar_lea.vmem %s3, %s874
          // Predicated region
          $region37: #{net_forward.5} parent=35 // pred_check
            %p876 = pneg %p873
          $region38: #{net_forward.5} parent=35 // pred_check_branch
            %878 = sbr.rel (%p876) target = $region40
          $region39: #{net_forward.5} parent=35 // pred_region
            // Predicated region
            $region41: #{net_forward.5} parent=39 // pred_check
              _
            $region42: #{net_forward.5} parent=39 // pred_check_branch
              %880 = sbr.rel (0) target = $region44
            $region43: #{net_forward.5} parent=39 // pred_region
              // Predicated region
              $region63: #{net_forward.5} parent=43 // pred_check
                _
              $region64: #{net_forward.5} parent=43 // pred_check_branch
                %992 = sbr.rel (0) target = $region66
              $region65: #{net_forward.5} parent=43 // pred_region
                %s993 = sshrl.u32 %s871, 5
                // While loop
                $region67: #{net_forward.5} parent=65 // loop_pre_header
                  _
                $region68: #{net_forward.5} parent=65 // loop_header
                  %s995 = sphi 0, %s997
                  %p996 = scmp.ge.s32.totalorder %s995, %s993
                  %s1000 = sphi 0, %s1069
                  %s1001 = sphi %s864, %s1072
                  %s1002 = sphi %s875, %s1073
                $region69: #{net_forward.5} parent=65 // loop_header_branch
                  %999 = sbr.rel (%p996) target = $region73
                $region70: #{net_forward.5} parent=65 // loop_body
                  %v1003 = vld [vmem:[%s1001] sm:$0xff]
                  %1004 = vst [vmem:[%s1002] sm:$0xff] %v1003
                  %v1005 = vld [vmem:[%s1001 + $0x8] sm:$0xff]
                  %1006 = vst [vmem:[%s1002 + $0x8] sm:$0xff] %v1005
                  %v1007 = vld [vmem:[%s1001 + $0x10] sm:$0xff]
                  %1008 = vst [vmem:[%s1002 + $0x10] sm:$0xff] %v1007
                  %v1009 = vld [vmem:[%s1001 + $0x18] sm:$0xff]
                  %1010 = vst [vmem:[%s1002 + $0x18] sm:$0xff] %v1009
                  %v1011 = vld [vmem:[%s1001 + $0x20] sm:$0xff]
                  %1012 = vst [vmem:[%s1002 + $0x20] sm:$0xff] %v1011
                  %v1013 = vld [vmem:[%s1001 + $0x28] sm:$0xff]
                  %1014 = vst [vmem:[%s1002 + $0x28] sm:$0xff] %v1013
                  %v1015 = vld [vmem:[%s1001 + $0x30] sm:$0xff]
                  %1016 = vst [vmem:[%s1002 + $0x30] sm:$0xff] %v1015
                  %v1017 = vld [vmem:[%s1001 + $0x38] sm:$0xff]
                  %1018 = vst [vmem:[%s1002 + $0x38] sm:$0xff] %v1017
                  %v1019 = vld [vmem:[%s1001 + $0x40] sm:$0xff]
                  %1020 = vst [vmem:[%s1002 + $0x40] sm:$0xff] %v1019
                  %v1021 = vld [vmem:[%s1001 + $0x48] sm:$0xff]
                  %1022 = vst [vmem:[%s1002 + $0x48] sm:$0xff] %v1021
                  %v1023 = vld [vmem:[%s1001 + $0x50] sm:$0xff]
                  %1024 = vst [vmem:[%s1002 + $0x50] sm:$0xff] %v1023
                  %v1025 = vld [vmem:[%s1001 + $0x58] sm:$0xff]
                  %1026 = vst [vmem:[%s1002 + $0x58] sm:$0xff] %v1025
                  %v1027 = vld [vmem:[%s1001 + $0x60] sm:$0xff]
                  %1028 = vst [vmem:[%s1002 + $0x60] sm:$0xff] %v1027
                  %v1029 = vld [vmem:[%s1001 + $0x68] sm:$0xff]
                  %1030 = vst [vmem:[%s1002 + $0x68] sm:$0xff] %v1029
                  %v1031 = vld [vmem:[%s1001 + $0x70] sm:$0xff]
                  %1032 = vst [vmem:[%s1002 + $0x70] sm:$0xff] %v1031
                  %v1033 = vld [vmem:[%s1001 + $0x78] sm:$0xff]
                  %1034 = vst [vmem:[%s1002 + $0x78] sm:$0xff] %v1033
                  %v1035 = vld [vmem:[%s1001 + $0x80] sm:$0xff]
                  %1036 = vst [vmem:[%s1002 + $0x80] sm:$0xff] %v1035
                  %v1037 = vld [vmem:[%s1001 + $0x88] sm:$0xff]
                  %1038 = vst [vmem:[%s1002 + $0x88] sm:$0xff] %v1037
                  %v1039 = vld [vmem:[%s1001 + $0x90] sm:$0xff]
                  %1040 = vst [vmem:[%s1002 + $0x90] sm:$0xff] %v1039
                  %v1041 = vld [vmem:[%s1001 + $0x98] sm:$0xff]
                  %1042 = vst [vmem:[%s1002 + $0x98] sm:$0xff] %v1041
                  %v1043 = vld [vmem:[%s1001 + $0xa0] sm:$0xff]
                  %1044 = vst [vmem:[%s1002 + $0xa0] sm:$0xff] %v1043
                  %v1045 = vld [vmem:[%s1001 + $0xa8] sm:$0xff]
                  %1046 = vst [vmem:[%s1002 + $0xa8] sm:$0xff] %v1045
                  %v1047 = vld [vmem:[%s1001 + $0xb0] sm:$0xff]
                  %1048 = vst [vmem:[%s1002 + $0xb0] sm:$0xff] %v1047
                  %v1049 = vld [vmem:[%s1001 + $0xb8] sm:$0xff]
                  %1050 = vst [vmem:[%s1002 + $0xb8] sm:$0xff] %v1049
                  %v1051 = vld [vmem:[%s1001 + $0xc0] sm:$0xff]
                  %1052 = vst [vmem:[%s1002 + $0xc0] sm:$0xff] %v1051
                  %v1053 = vld [vmem:[%s1001 + $0xc8] sm:$0xff]
                  %1054 = vst [vmem:[%s1002 + $0xc8] sm:$0xff] %v1053
                  %v1055 = vld [vmem:[%s1001 + $0xd0] sm:$0xff]
                  %1056 = vst [vmem:[%s1002 + $0xd0] sm:$0xff] %v1055
                  %v1057 = vld [vmem:[%s1001 + $0xd8] sm:$0xff]
                  %1058 = vst [vmem:[%s1002 + $0xd8] sm:$0xff] %v1057
                  %v1059 = vld [vmem:[%s1001 + $0xe0] sm:$0xff]
                  %1060 = vst [vmem:[%s1002 + $0xe0] sm:$0xff] %v1059
                  %v1061 = vld [vmem:[%s1001 + $0xe8] sm:$0xff]
                  %1062 = vst [vmem:[%s1002 + $0xe8] sm:$0xff] %v1061
                  %v1063 = vld [vmem:[%s1001 + $0xf0] sm:$0xff]
                  %1064 = vst [vmem:[%s1002 + $0xf0] sm:$0xff] %v1063
                  %v1065 = vld [vmem:[%s1001 + $0xf8] sm:$0xff]
                  %1066 = vst [vmem:[%s1002 + $0xf8] sm:$0xff] %v1065
                  %s1067 = sadd.s32 1, %s1000
                  %p1068 = scmp.ge.s32.totalorder %s1067, %s993
                  %s1069 = scalar_select %p1068, 0, %s1067
                  %s1070 = smul.u32 %s1069, 256
                  %s1071 = smul.u32 %s1069, 256
                  %s1072 = scalar_lea.vmem %s864, %s1070 [#allocation2]
                  %s1073 = scalar_lea.vmem %s875, %s1071
                $region71: #{net_forward.5} parent=65 // loop_footer
                  %s997 = sadd.s32 %s995, 1
                $region72: #{net_forward.5} parent=65 // loop_footer_branch
                  %994 = sbr.rel target = $region68
                $region73: #{net_forward.5} parent=65 // loop_exit
                  _
                %s1074 = sshrl.u32 %s871, 5
                %s1075 = sand.u32 %s871, 31
                %s1076 = smul.u32 %s1074, 32
                %s1077 = smul.u32 8, %s1076
                %s1078 = scalar_lea.vmem %s864, %s1077 [#allocation2]
                %s1079 = smul.u32 8, %s1076
                %s1080 = scalar_lea.vmem %s875, %s1079
                // While loop
                $region74: #{net_forward.5} parent=65 // loop_pre_header
                  _
                $region75: #{net_forward.5} parent=65 // loop_header
                  %s1082 = sphi 0, %s1084
                  %p1083 = scmp.ge.s32.totalorder %s1082, %s1075
                  %s1087 = sphi 0, %s1094
                  %s1088 = sphi %s1078, %s1097
                  %s1089 = sphi %s1080, %s1098
                $region76: #{net_forward.5} parent=65 // loop_header_branch
                  %1086 = sbr.rel (%p1083) target = $region80
                $region77: #{net_forward.5} parent=65 // loop_body
                  %v1090 = vld [vmem:[%s1088] sm:$0xff]
                  %1091 = vst [vmem:[%s1089] sm:$0xff] %v1090
                  %s1092 = sadd.s32 1, %s1087
                  %p1093 = scmp.ge.s32.totalorder %s1092, %s1075
                  %s1094 = scalar_select %p1093, 0, %s1092
                  %s1095 = smul.u32 %s1094, 8
                  %s1096 = smul.u32 %s1094, 8
                  %s1097 = scalar_lea.vmem %s1078, %s1095 [#allocation2]
                  %s1098 = scalar_lea.vmem %s1080, %s1096
                $region78: #{net_forward.5} parent=65 // loop_footer
                  %s1084 = sadd.s32 %s1082, 1
                $region79: #{net_forward.5} parent=65 // loop_footer_branch
                  %1081 = sbr.rel target = $region75
                $region80: #{net_forward.5} parent=65 // loop_exit
                  _
              $region66: #{net_forward.5} parent=43 // pred_fallthru
                _
              // Predicated region
              $region81: #{net_forward.5} parent=43 // pred_check
                _
              $region82: #{net_forward.5} parent=43 // pred_check_branch
                %1100 = sbr.rel target = $region84
              $region83: #{net_forward.5} parent=43 // pred_region
                _
              $region84: #{net_forward.5} parent=43 // pred_fallthru
                _
            $region44: #{net_forward.5} parent=39 // pred_fallthru
              _
            // Predicated region
            $region45: #{net_forward.5} parent=39 // pred_check
              _
            $region46: #{net_forward.5} parent=39 // pred_check_branch
              %882 = sbr.rel target = $region48
            $region47: #{net_forward.5} parent=39 // pred_region
              %s884 = ssub.s32 256, 1
              %s885 = sshrl.u32 %s871, 5
              // While loop
              $region49: #{net_forward.5} parent=47 // loop_pre_header
                _
              $region50: #{net_forward.5} parent=47 // loop_header
                %s887 = sphi 0, %s889
                %p888 = scmp.ge.s32.totalorder %s887, %s885
                %s892 = sphi 0, %s961
                %s893 = sphi %s864, %s964
                %s894 = sphi %s875, %s965
              $region51: #{net_forward.5} parent=47 // loop_header_branch
                %891 = sbr.rel (%p888) target = $region55
              $region52: #{net_forward.5} parent=47 // loop_body
                %v895 = vld [vmem:[%s893] sm:%s884]
                %896 = vst [vmem:[%s894] sm:%s884] %v895
                %v897 = vld [vmem:[%s893 + $0x8] sm:%s884]
                %898 = vst [vmem:[%s894 + $0x8] sm:%s884] %v897
                %v899 = vld [vmem:[%s893 + $0x10] sm:%s884]
                %900 = vst [vmem:[%s894 + $0x10] sm:%s884] %v899
                %v901 = vld [vmem:[%s893 + $0x18] sm:%s884]
                %902 = vst [vmem:[%s894 + $0x18] sm:%s884] %v901
                %v903 = vld [vmem:[%s893 + $0x20] sm:%s884]
                %904 = vst [vmem:[%s894 + $0x20] sm:%s884] %v903
                %v905 = vld [vmem:[%s893 + $0x28] sm:%s884]
                %906 = vst [vmem:[%s894 + $0x28] sm:%s884] %v905
                %v907 = vld [vmem:[%s893 + $0x30] sm:%s884]
                %908 = vst [vmem:[%s894 + $0x30] sm:%s884] %v907
                %v909 = vld [vmem:[%s893 + $0x38] sm:%s884]
                %910 = vst [vmem:[%s894 + $0x38] sm:%s884] %v909
                %v911 = vld [vmem:[%s893 + $0x40] sm:%s884]
                %912 = vst [vmem:[%s894 + $0x40] sm:%s884] %v911
                %v913 = vld [vmem:[%s893 + $0x48] sm:%s884]
                %914 = vst [vmem:[%s894 + $0x48] sm:%s884] %v913
                %v915 = vld [vmem:[%s893 + $0x50] sm:%s884]
                %916 = vst [vmem:[%s894 + $0x50] sm:%s884] %v915
                %v917 = vld [vmem:[%s893 + $0x58] sm:%s884]
                %918 = vst [vmem:[%s894 + $0x58] sm:%s884] %v917
                %v919 = vld [vmem:[%s893 + $0x60] sm:%s884]
                %920 = vst [vmem:[%s894 + $0x60] sm:%s884] %v919
                %v921 = vld [vmem:[%s893 + $0x68] sm:%s884]
                %922 = vst [vmem:[%s894 + $0x68] sm:%s884] %v921
                %v923 = vld [vmem:[%s893 + $0x70] sm:%s884]
                %924 = vst [vmem:[%s894 + $0x70] sm:%s884] %v923
                %v925 = vld [vmem:[%s893 + $0x78] sm:%s884]
                %926 = vst [vmem:[%s894 + $0x78] sm:%s884] %v925
                %v927 = vld [vmem:[%s893 + $0x80] sm:%s884]
                %928 = vst [vmem:[%s894 + $0x80] sm:%s884] %v927
                %v929 = vld [vmem:[%s893 + $0x88] sm:%s884]
                %930 = vst [vmem:[%s894 + $0x88] sm:%s884] %v929
                %v931 = vld [vmem:[%s893 + $0x90] sm:%s884]
                %932 = vst [vmem:[%s894 + $0x90] sm:%s884] %v931
                %v933 = vld [vmem:[%s893 + $0x98] sm:%s884]
                %934 = vst [vmem:[%s894 + $0x98] sm:%s884] %v933
                %v935 = vld [vmem:[%s893 + $0xa0] sm:%s884]
                %936 = vst [vmem:[%s894 + $0xa0] sm:%s884] %v935
                %v937 = vld [vmem:[%s893 + $0xa8] sm:%s884]
                %938 = vst [vmem:[%s894 + $0xa8] sm:%s884] %v937
                %v939 = vld [vmem:[%s893 + $0xb0] sm:%s884]
                %940 = vst [vmem:[%s894 + $0xb0] sm:%s884] %v939
                %v941 = vld [vmem:[%s893 + $0xb8] sm:%s884]
                %942 = vst [vmem:[%s894 + $0xb8] sm:%s884] %v941
                %v943 = vld [vmem:[%s893 + $0xc0] sm:%s884]
                %944 = vst [vmem:[%s894 + $0xc0] sm:%s884] %v943
                %v945 = vld [vmem:[%s893 + $0xc8] sm:%s884]
                %946 = vst [vmem:[%s894 + $0xc8] sm:%s884] %v945
                %v947 = vld [vmem:[%s893 + $0xd0] sm:%s884]
                %948 = vst [vmem:[%s894 + $0xd0] sm:%s884] %v947
                %v949 = vld [vmem:[%s893 + $0xd8] sm:%s884]
                %950 = vst [vmem:[%s894 + $0xd8] sm:%s884] %v949
                %v951 = vld [vmem:[%s893 + $0xe0] sm:%s884]
                %952 = vst [vmem:[%s894 + $0xe0] sm:%s884] %v951
                %v953 = vld [vmem:[%s893 + $0xe8] sm:%s884]
                %954 = vst [vmem:[%s894 + $0xe8] sm:%s884] %v953
                %v955 = vld [vmem:[%s893 + $0xf0] sm:%s884]
                %956 = vst [vmem:[%s894 + $0xf0] sm:%s884] %v955
                %v957 = vld [vmem:[%s893 + $0xf8] sm:%s884]
                %958 = vst [vmem:[%s894 + $0xf8] sm:%s884] %v957
                %s959 = sadd.s32 1, %s892
                %p960 = scmp.ge.s32.totalorder %s959, %s885
                %s961 = scalar_select %p960, 0, %s959
                %s962 = smul.u32 %s961, 256
                %s963 = smul.u32 %s961, 256
                %s964 = scalar_lea.vmem %s864, %s962 [#allocation2]
                %s965 = scalar_lea.vmem %s875, %s963
              $region53: #{net_forward.5} parent=47 // loop_footer
                %s889 = sadd.s32 %s887, 1
              $region54: #{net_forward.5} parent=47 // loop_footer_branch
                %886 = sbr.rel target = $region50
              $region55: #{net_forward.5} parent=47 // loop_exit
                _
              %s966 = sshrl.u32 %s871, 5
              %s967 = sand.u32 %s871, 31
              %s968 = smul.u32 %s966, 32
              %s969 = smul.u32 8, %s968
              %s970 = scalar_lea.vmem %s864, %s969 [#allocation2]
              %s971 = smul.u32 8, %s968
              %s972 = scalar_lea.vmem %s875, %s971
              // While loop
              $region56: #{net_forward.5} parent=47 // loop_pre_header
                _
              $region57: #{net_forward.5} parent=47 // loop_header
                %s974 = sphi 0, %s976
                %p975 = scmp.ge.s32.totalorder %s974, %s967
                %s979 = sphi 0, %s986
                %s980 = sphi %s970, %s989
                %s981 = sphi %s972, %s990
              $region58: #{net_forward.5} parent=47 // loop_header_branch
                %978 = sbr.rel (%p975) target = $region62
              $region59: #{net_forward.5} parent=47 // loop_body
                %v982 = vld [vmem:[%s980] sm:%s884]
                %983 = vst [vmem:[%s981] sm:%s884] %v982
                %s984 = sadd.s32 1, %s979
                %p985 = scmp.ge.s32.totalorder %s984, %s967
                %s986 = scalar_select %p985, 0, %s984
                %s987 = smul.u32 %s986, 8
                %s988 = smul.u32 %s986, 8
                %s989 = scalar_lea.vmem %s970, %s987 [#allocation2]
                %s990 = scalar_lea.vmem %s972, %s988
              $region60: #{net_forward.5} parent=47 // loop_footer
                %s976 = sadd.s32 %s974, 1
              $region61: #{net_forward.5} parent=47 // loop_footer_branch
                %973 = sbr.rel target = $region57
              $region62: #{net_forward.5} parent=47 // loop_exit
                _
            $region48: #{net_forward.5} parent=39 // pred_fallthru
              _
          $region40: #{net_forward.5} parent=35 // pred_fallthru
            _
          %1101 = vnop
        $region36: #{net_forward.5} parent=31 // pred_fallthru
          _
      $region32: #{net_forward.5} parent=5 // pred_fallthru
        _
      %p1102 = scmp.le.s32.totalorder 2, %s9
      // Predicated region
      $region85: #{net_forward.5} parent=5 // pred_check
        %p1103 = pneg %p1102
      $region86: #{net_forward.5} parent=5 // pred_check_branch
        %1105 = sbr.rel (%p1103) target = $region88
      $region87: #{net_forward.5} parent=5 // pred_region
        %s1106 = ssub.s32 %s9, 2
        // Predicated region
        $region89: #{net_forward.5} parent=87 // pred_check
          %p1107 = pneg %p106
        $region90: #{net_forward.5} parent=87 // pred_check_branch
          %1109 = sbr.rel (%p1107) target = $region92
        $region91: #{net_forward.5} parent=87 // pred_region
          %s1110 = sand.u32 %s91, 1
          %s1111 = sand.u32 %s91, 1
          %s1112 = smul.addr %s1111, 512
          %s1113 = scalar_lea.vmem [#allocation2], %s1112
        $region92: #{net_forward.5} parent=87 // pred_fallthru
          _
      $region88: #{net_forward.5} parent=5 // pred_fallthru
        _
    $region6: #{net_forward.5} parent=1 // loop_footer
      %s13 = sadd.s32 1, %s9
    $region7: #{net_forward.5} parent=1 // loop_footer_branch
      %8 = sbr.rel target = $region3
    $region8: #{net_forward.5} parent=1 // loop_exit
      _

// kernel: net_forward.6
$region0: #{net_forward.6}
  #allocation0 [shape = 'u32[]', space=smem, size = 0x4, offset = 0x4, fixed_abs, tag = 'smem constant byte address 0x4 - core index']
  #allocation1 [shape = 'u32[72,128]{1,0:T(1,128)}', space=vmem, size = 0x9000, scoped, tag = 'internal scratch']
  %s0 = inlined_call_operand.vmem [shape: f32[2,14,2,14,256], index: 0, kind: input, shape index: {}]
  %s1 = inlined_call_operand.vmem [shape: f32[2,14,14,128], index: 1, kind: output, shape index: {}]
  %s2 = sld [smem:[#allocation0]]
  $region37: #{net_forward.6} parent=0
    _
  %s4 = ssub.s32 1, %s2
  %s5 = scalar_select 0, %s4, %s2
  loop: start=0, step=1, limit=4
  $region2: #{net_forward.6} parent=0 // loop_pre_header
    _
  $region3: #{net_forward.6} parent=0 // loop_header
    %s7 = sphi 0, %s11
    %p8 = scmp.ge.s32.totalorder %s7, 4
    %s17 = sphi 0, %s19
    %s20 = sphi 0, %s17
    %s21 = sphi 0, %s20
    %s37 = sphi 0, %s21
    %s43 = sphi 0, %s45
    %s46 = sphi 0, %s43
    %s47 = sphi 0, %s46
    %s63 = sphi 0, %s47
  $region4: #{net_forward.6} parent=0 // loop_header_branch
    %10 = sbr.rel (%p8) target = $region8
  $region5: #{net_forward.6} parent=0 // loop_body
    %s12 = ssub.s32 %s7, 1
    %s13 = ssub.s32 %s7, 2
    %s14 = sadd.s32 %s7, 1
    %s15 = ssub.s32 %s7, %s14
    %p16 = scmp.eq.s32.totalorder %s15, 0
    %s18 = sadd.s32 %s17, 1
    %s19 = scalar_select %p16, %s17, %s18
    %p22 = pneg %p16
    %p23 = scmp.eq.s32.totalorder %s7, 1
    %p24 = por %p22, %p23
    %p25 = scmp.ne.s32.totalorder %s17, %s20
    %p26 = scmp.eq.s32.totalorder %s7, 0
    %p27 = por %p25, %p26
    %p28 = scmp.ne.s32.totalorder %s17, %s20
    %p29 = scmp.eq.s32.totalorder %s12, 1
    %p30 = por %p28, %p29
    %p31 = scmp.ne.s32.totalorder %s20, %s21
    %p32 = scmp.eq.s32.totalorder %s12, 0
    %p33 = por %p31, %p32
    %p34 = scmp.ne.s32.totalorder %s20, %s21
    %p35 = scmp.eq.s32.totalorder %s13, 1
    %p36 = por %p34, %p35
    %p38 = scmp.ne.s32.totalorder %s21, %s37
    %p39 = scmp.eq.s32.totalorder %s13, 0
    %p40 = por %p38, %p39
    %s41 = ssub.s32 %s7, %s14
    %p42 = scmp.eq.s32.totalorder %s41, 0
    %s44 = sadd.s32 %s43, 1
    %s45 = scalar_select %p42, %s43, %s44
    %p48 = pneg %p42
    %p49 = scmp.eq.s32.totalorder %s7, 1
    %p50 = por %p48, %p49
    %p51 = scmp.ne.s32.totalorder %s43, %s46
    %p52 = scmp.eq.s32.totalorder %s7, 0
    %p53 = por %p51, %p52
    %p54 = scmp.ne.s32.totalorder %s43, %s46
    %p55 = scmp.eq.s32.totalorder %s12, 1
    %p56 = por %p54, %p55
    %p57 = scmp.ne.s32.totalorder %s46, %s47
    %p58 = scmp.eq.s32.totalorder %s12, 0
    %p59 = por %p57, %p58
    %p60 = scmp.ne.s32.totalorder %s46, %s47
    %p61 = scmp.eq.s32.totalorder %s13, 1
    %p62 = por %p60, %p61
    %p64 = scmp.ne.s32.totalorder %s47, %s63
    %p65 = scmp.eq.s32.totalorder %s13, 0
    %p66 = por %p64, %p65
    %p67 = scmp.le.s32.totalorder 1, %s7
    %p68 = scmp.lt.s32.totalorder %s7, 3
    %p69 = pnand %p67, %p68
    %p70 = pneg %p69
    // Predicated region
    $region9: #{net_forward.6} parent=5 // pred_check
      _
    $region10: #{net_forward.6} parent=5 // pred_check_branch
      %72 = sbr.rel (%p69) target = $region12
    $region11: #{net_forward.6} parent=5 // pred_region
      %s73 = ssub.s32 %s7, 1
    $region12: #{net_forward.6} parent=5 // pred_fallthru
      _
    %p74 = scmp.lt.s32.totalorder %s7, 2
    // Predicated region
    $region13: #{net_forward.6} parent=5 // pred_check
      %p75 = pneg %p74
    $region14: #{net_forward.6} parent=5 // pred_check_branch
      %77 = sbr.rel (%p75) target = $region16
    $region15: #{net_forward.6} parent=5 // pred_region
      // Predicated region
      $region17: #{net_forward.6} parent=15 // pred_check
        %p78 = pneg %p27
      $region18: #{net_forward.6} parent=15 // pred_check_branch
        %80 = sbr.rel (%p78) target = $region20
      $region19: #{net_forward.6} parent=15 // pred_region
        %p81 = scmp.lt.s32.totalorder %s7, 1
        %s82 = scalar_select %p81, %s7, 1
        %s83 = smul.addr %s82, 112
        %s84 = smul.addr %s83, 8
        %s85 = scalar_lea.vmem %s0, %s84
      $region20: #{net_forward.6} parent=15 // pred_fallthru
        _
    $region16: #{net_forward.6} parent=5 // pred_fallthru
      _
    %p86 = scmp.le.s32.totalorder 1, %s7
    %p87 = scmp.lt.s32.totalorder %s7, 3
    %p88 = pnand %p86, %p87
    %p89 = pneg %p88
    // Predicated region
    $region21: #{net_forward.6} parent=5 // pred_check
      _
    $region22: #{net_forward.6} parent=5 // pred_check_branch
      %91 = sbr.rel (%p88) target = $region24
    $region23: #{net_forward.6} parent=5 // pred_region
      %s92 = ssub.s32 %s7, 1
      %p93 = scmp.lt.s32.totalorder %s12, 1
      %s94 = scalar_select %p93, %s12, 1
      %s95 = smul.addr %s94, 112
      %s96 = smul.addr %s95, 8
      %s97 = scalar_lea.vmem %s0, %s96
      %p98 = pneg %p33
      %p99 = pneg %p30
      %p100 = pneg %p59
      %p101 = pneg %p56
      %p102 = scmp.lt.s32.totalorder %s12, 1
      %s103 = scalar_select %p102, %s12, 1
      %s104 = smul.addr %s103, 28
      %s105 = smul.addr %s104, 8
      %s106 = scalar_lea.vmem %s1, %s105
      %p107 = scmp.lt.s32.totalorder %s12, 1
      %s108 = scalar_select %p107, %s12, 1
      %s109 = smul.addr %s108, 112
      %s110 = smul.addr %s109, 8
      %s111 = scalar_lea.vmem %s0, %s110
      %p112 = scmp.lt.s32.totalorder %s12, 1
      %s113 = scalar_select %p112, %s12, 1
      %s114 = smul.addr %s113, 28
      %s115 = smul.addr %s114, 8
      %s116 = scalar_lea.vmem %s1, %s115
      %v117 = vld [vmem:[%s111] sm:$0xff]
      %v118 = vld [vmem:[%s111 + $0x8] sm:$0xff]
      %v119 = vld [vmem:[%s111 + $0x10] sm:$0x3f]
      %v120 = vld [vmem:[%s111 + $0x18] sm:$0x3f]
      %v121 = vld [vmem:[%s111 + $0x20] sm:$0xff]
      %v122 = vld [vmem:[%s111 + $0x28] sm:$0xff]
      %v123 = vld [vmem:[%s111 + $0x30] sm:$0x3f]
      %v124 = vld [vmem:[%s111 + $0x38] sm:$0x3f]
      %v125 = vld [vmem:[%s111 + $0x40] sm:$0xff]
      %v126 = vld [vmem:[%s111 + $0x48] sm:$0xff]
      %v127 = vld [vmem:[%s111 + $0x50] sm:$0x3f]
      %v128 = vld [vmem:[%s111 + $0x58] sm:$0x3f]
      %v129 = vld [vmem:[%s111 + $0x60] sm:$0xff]
      %v130 = vld [vmem:[%s111 + $0x68] sm:$0xff]
      %v131 = vld [vmem:[%s111 + $0x70] sm:$0x3f]
      %v132 = vld [vmem:[%s111 + $0x78] sm:$0x3f]
      %v133 = vld [vmem:[%s111 + $0x80] sm:$0xff]
      %v134 = vld [vmem:[%s111 + $0x88] sm:$0xff]
      %v135 = vld [vmem:[%s111 + $0x90] sm:$0x3f]
      %v136 = vld [vmem:[%s111 + $0x98] sm:$0x3f]
      %v137 = vld [vmem:[%s111 + $0xa0] sm:$0xff]
      %v138 = vld [vmem:[%s111 + $0xa8] sm:$0xff]
      %v139 = vld [vmem:[%s111 + $0xb0] sm:$0x3f]
      %v140 = vld [vmem:[%s111 + $0xb8] sm:$0x3f]
      %v141 = vld [vmem:[%s111 + $0xc0] sm:$0xff]
      %v142 = vld [vmem:[%s111 + $0xc8] sm:$0xff]
      %v143 = vld [vmem:[%s111 + $0xd0] sm:$0x3f]
      %v144 = vld [vmem:[%s111 + $0xd8] sm:$0x3f]
      %v145 = vld [vmem:[%s111 + $0xe0] sm:$0xff]
      %v146 = vld [vmem:[%s111 + $0xe8] sm:$0xff]
      %v147 = vld [vmem:[%s111 + $0xf0] sm:$0x3f]
      %v148 = vld [vmem:[%s111 + $0xf8] sm:$0x3f]
      %v149 = vld [vmem:[%s111 + $0x100] sm:$0xff]
      %v150 = vld [vmem:[%s111 + $0x108] sm:$0xff]
      %v151 = vld [vmem:[%s111 + $0x110] sm:$0x3f]
      %v152 = vld [vmem:[%s111 + $0x118] sm:$0x3f]
      %v153 = vld [vmem:[%s111 + $0x120] sm:$0xff]
      %v154 = vld [vmem:[%s111 + $0x128] sm:$0xff]
      %v155 = vld [vmem:[%s111 + $0x130] sm:$0x3f]
      %v156 = vld [vmem:[%s111 + $0x138] sm:$0x3f]
      %v157 = vld [vmem:[%s111 + $0x140] sm:$0xff]
      %v158 = vld [vmem:[%s111 + $0x148] sm:$0xff]
      %v159 = vld [vmem:[%s111 + $0x150] sm:$0x3f]
      %v160 = vld [vmem:[%s111 + $0x158] sm:$0x3f]
      %v161 = vld [vmem:[%s111 + $0x160] sm:$0xff]
      %v162 = vld [vmem:[%s111 + $0x168] sm:$0xff]
      %v163 = vld [vmem:[%s111 + $0x170] sm:$0x3f]
      %v164 = vld [vmem:[%s111 + $0x178] sm:$0x3f]
      %v165 = vld [vmem:[%s111 + $0x180] sm:$0xff]
      %v166 = vld [vmem:[%s111 + $0x188] sm:$0xff]
      %v167 = vld [vmem:[%s111 + $0x190] sm:$0x3f]
      %v168 = vld [vmem:[%s111 + $0x198] sm:$0x3f]
      %v169 = vld [vmem:[%s111 + $0x1a0] sm:$0xff]
      %v170 = vld [vmem:[%s111 + $0x1a8] sm:$0xff]
      %v171 = vld [vmem:[%s111 + $0x1b0] sm:$0x3f]
      %v172 = vld [vmem:[%s111 + $0x1b8] sm:$0x3f]
      %v173 = vld [vmem:[%s111 + $0x1c0] sm:$0xff]
      %v174 = vld [vmem:[%s111 + $0x1c8] sm:$0xff]
      %v175 = vld [vmem:[%s111 + $0x1d0] sm:$0x3f]
      %v176 = vld [vmem:[%s111 + $0x1d8] sm:$0x3f]
      %v177 = vld [vmem:[%s111 + $0x1e0] sm:$0xff]
      %v178 = vld [vmem:[%s111 + $0x1e8] sm:$0xff]
      %v179 = vld [vmem:[%s111 + $0x1f0] sm:$0x3f]
      %v180 = vld [vmem:[%s111 + $0x1f8] sm:$0x3f]
      %v181 = vld [vmem:[%s111 + $0x200] sm:$0xff]
      %v182 = vld [vmem:[%s111 + $0x208] sm:$0xff]
      %v183 = vld [vmem:[%s111 + $0x210] sm:$0x3f]
      %v184 = vld [vmem:[%s111 + $0x218] sm:$0x3f]
      %v185 = vld [vmem:[%s111 + $0x220] sm:$0xff]
      %v186 = vld [vmem:[%s111 + $0x228] sm:$0xff]
      %v187 = vld [vmem:[%s111 + $0x230] sm:$0x3f]
      %v188 = vld [vmem:[%s111 + $0x238] sm:$0x3f]
      %v189 = vld [vmem:[%s111 + $0x240] sm:$0xff]
      %v190 = vld [vmem:[%s111 + $0x248] sm:$0xff]
      %v191 = vld [vmem:[%s111 + $0x250] sm:$0x3f]
      %v192 = vld [vmem:[%s111 + $0x258] sm:$0x3f]
      %v193 = vld [vmem:[%s111 + $0x260] sm:$0xff]
      %v194 = vld [vmem:[%s111 + $0x268] sm:$0xff]
      %v195 = vld [vmem:[%s111 + $0x270] sm:$0x3f]
      %v196 = vld [vmem:[%s111 + $0x278] sm:$0x3f]
      %v197 = vld [vmem:[%s111 + $0x280] sm:$0xff]
      %v198 = vld [vmem:[%s111 + $0x288] sm:$0xff]
      %v199 = vld [vmem:[%s111 + $0x290] sm:$0x3f]
      %v200 = vld [vmem:[%s111 + $0x298] sm:$0x3f]
      %v201 = vld [vmem:[%s111 + $0x2a0] sm:$0xff]
      %v202 = vld [vmem:[%s111 + $0x2a8] sm:$0xff]
      %v203 = vld [vmem:[%s111 + $0x2b0] sm:$0x3f]
      %v204 = vld [vmem:[%s111 + $0x2b8] sm:$0x3f]
      %v205 = vld [vmem:[%s111 + $0x2c0] sm:$0xff]
      %v206 = vld [vmem:[%s111 + $0x2c8] sm:$0xff]
      %v207 = vld [vmem:[%s111 + $0x2d0] sm:$0x3f]
      %v208 = vld [vmem:[%s111 + $0x2d8] sm:$0x3f]
      %v209 = vld [vmem:[%s111 + $0x2e0] sm:$0xff]
      %v210 = vld [vmem:[%s111 + $0x2e8] sm:$0xff]
      %v211 = vld [vmem:[%s111 + $0x2f0] sm:$0x3f]
      %v212 = vld [vmem:[%s111 + $0x2f8] sm:$0x3f]
      %v213 = vld [vmem:[%s111 + $0x300] sm:$0xff]
      %v214 = vld [vmem:[%s111 + $0x308] sm:$0xff]
      %v215 = vld [vmem:[%s111 + $0x310] sm:$0x3f]
      %v216 = vld [vmem:[%s111 + $0x318] sm:$0x3f]
      %v217 = vld [vmem:[%s111 + $0x320] sm:$0xff]
      %v218 = vld [vmem:[%s111 + $0x328] sm:$0xff]
      %v219 = vld [vmem:[%s111 + $0x330] sm:$0x3f]
      %v220 = vld [vmem:[%s111 + $0x338] sm:$0x3f]
      %v221 = vld [vmem:[%s111 + $0x340] sm:$0xff]
      %v222 = vld [vmem:[%s111 + $0x348] sm:$0xff]
      %v223 = vld [vmem:[%s111 + $0x350] sm:$0x3f]
      %v224 = vld [vmem:[%s111 + $0x358] sm:$0x3f]
      %v225 = vld [vmem:[%s111 + $0x360] sm:$0xff]
      %v226 = vld [vmem:[%s111 + $0x368] sm:$0xff]
      %v227 = vld [vmem:[%s111 + $0x370] sm:$0x3f]
      %v228 = vld [vmem:[%s111 + $0x378] sm:$0x3f]
      %v229 = vmax.f32 %v117, %v121
      %v230 = vmax.f32 %v118, %v122
      %v231 = vmax.f32 %v119, %v123
      %v232 = vmax.f32 %v120, %v124
      %v233 = vmax.f32 %v125, %v129
      %v234 = vmax.f32 %v126, %v130
      %v235 = vmax.f32 %v127, %v131
      %v236 = vmax.f32 %v128, %v132
      %v237 = vmax.f32 %v133, %v137
      %v238 = vmax.f32 %v134, %v138
      %v239 = vmax.f32 %v135, %v139
      %v240 = vmax.f32 %v136, %v140
      %v241 = vmax.f32 %v141, %v145
      %v242 = vmax.f32 %v142, %v146
      %v243 = vmax.f32 %v143, %v147
      %v244 = vmax.f32 %v144, %v148
      %v245 = vmax.f32 %v149, %v153
      %v246 = vmax.f32 %v150, %v154
      %v247 = vmax.f32 %v151, %v155
      %v248 = vmax.f32 %v152, %v156
      %v249 = vmax.f32 %v157, %v161
      %v250 = vmax.f32 %v158, %v162
      %v251 = vmax.f32 %v159, %v163
      %v252 = vmax.f32 %v160, %v164
      %v253 = vmax.f32 %v165, %v169
      %v254 = vmax.f32 %v166, %v170
      %v255 = vmax.f32 %v167, %v171
      %v256 = vmax.f32 %v168, %v172
      %v257 = vmax.f32 %v173, %v177
      %v258 = vmax.f32 %v174, %v178
      %v259 = vmax.f32 %v175, %v179
      %v260 = vmax.f32 %v176, %v180
      %v261 = vmax.f32 %v181, %v185
      %v262 = vmax.f32 %v182, %v186
      %v263 = vmax.f32 %v183, %v187
      %v264 = vmax.f32 %v184, %v188
      %v265 = vmax.f32 %v189, %v193
      %v266 = vmax.f32 %v190, %v194
      %v267 = vmax.f32 %v191, %v195
      %v268 = vmax.f32 %v192, %v196
      %v269 = vmax.f32 %v197, %v201
      %v270 = vmax.f32 %v198, %v202
      %v271 = vmax.f32 %v199, %v203
      %v272 = vmax.f32 %v200, %v204
      %v273 = vmax.f32 %v205, %v209
      %v274 = vmax.f32 %v206, %v210
      %v275 = vmax.f32 %v207, %v211
      %v276 = vmax.f32 %v208, %v212
      %v277 = vmax.f32 %v213, %v217
      %v278 = vmax.f32 %v214, %v218
      %v279 = vmax.f32 %v215, %v219
      %v280 = vmax.f32 %v216, %v220
      %v281 = vmax.f32 %v221, %v225
      %v282 = vmax.f32 %v222, %v226
      %v283 = vmax.f32 %v223, %v227
      %v284 = vmax.f32 %v224, %v228
      %v285 = vmax.f32 %v229, %v230
      %v286 = vmax.f32 %v231, %v232
      %v287 = vmax.f32 %v233, %v234
      %v288 = vmax.f32 %v235, %v236
      %v289 = vmax.f32 %v237, %v238
      %v290 = vmax.f32 %v239, %v240
      %v291 = vmax.f32 %v241, %v242
      %v292 = vmax.f32 %v243, %v244
      %v293 = vmax.f32 %v245, %v246
      %v294 = vmax.f32 %v247, %v248
      %v295 = vmax.f32 %v249, %v250
      %v296 = vmax.f32 %v251, %v252
      %v297 = vmax.f32 %v253, %v254
      %v298 = vmax.f32 %v255, %v256
      %v299 = vmax.f32 %v257, %v258
      %v300 = vmax.f32 %v259, %v260
      %v301 = vmax.f32 %v261, %v262
      %v302 = vmax.f32 %v263, %v264
      %v303 = vmax.f32 %v265, %v266
      %v304 = vmax.f32 %v267, %v268
      %v305 = vmax.f32 %v269, %v270
      %v306 = vmax.f32 %v271, %v272
      %v307 = vmax.f32 %v273, %v274
      %v308 = vmax.f32 %v275, %v276
      %v309 = vmax.f32 %v277, %v278
      %v310 = vmax.f32 %v279, %v280
      %v311 = vmax.f32 %v281, %v282
      %v312 = vmax.f32 %v283, %v284
      %313 = vst [vmem:[%s116] sm:$0xff] %v285
      %314 = vst [vmem:[%s116 + $0x8] sm:$0x3f] %v286
      %315 = vst [vmem:[%s116 + $0x10] sm:$0xff] %v287
      %316 = vst [vmem:[%s116 + $0x18] sm:$0x3f] %v288
      %317 = vst [vmem:[%s116 + $0x20] sm:$0xff] %v289
      %318 = vst [vmem:[%s116 + $0x28] sm:$0x3f] %v290
      %319 = vst [vmem:[%s116 + $0x30] sm:$0xff] %v291
      %320 = vst [vmem:[%s116 + $0x38] sm:$0x3f] %v292
      %321 = vst [vmem:[%s116 + $0x40] sm:$0xff] %v293
      %322 = vst [vmem:[%s116 + $0x48] sm:$0x3f] %v294
      %323 = vst [vmem:[%s116 + $0x50] sm:$0xff] %v295
      %324 = vst [vmem:[%s116 + $0x58] sm:$0x3f] %v296
      %325 = vst [vmem:[%s116 + $0x60] sm:$0xff] %v297
      %326 = vst [vmem:[%s116 + $0x68] sm:$0x3f] %v298
      %327 = vst [vmem:[%s116 + $0x70] sm:$0xff] %v299
      %328 = vst [vmem:[%s116 + $0x78] sm:$0x3f] %v300
      %329 = vst [vmem:[%s116 + $0x80] sm:$0xff] %v301
      %330 = vst [vmem:[%s116 + $0x88] sm:$0x3f] %v302
      %331 = vst [vmem:[%s116 + $0x90] sm:$0xff] %v303
      %332 = vst [vmem:[%s116 + $0x98] sm:$0x3f] %v304
      %333 = vst [vmem:[%s116 + $0xa0] sm:$0xff] %v305
      %334 = vst [vmem:[%s116 + $0xa8] sm:$0x3f] %v306
      %335 = vst [vmem:[%s116 + $0xb0] sm:$0xff] %v307
      %336 = vst [vmem:[%s116 + $0xb8] sm:$0x3f] %v308
      %337 = vst [vmem:[%s116 + $0xc0] sm:$0xff] %v309
      %338 = vst [vmem:[%s116 + $0xc8] sm:$0x3f] %v310
      %339 = vst [vmem:[%s116 + $0xd0] sm:$0xff] %v311
      %340 = vst [vmem:[%s116 + $0xd8] sm:$0x3f] %v312
      %p341 = scmp.lt.s32.totalorder %s12, 1
      %s342 = scalar_select %p341, %s12, 1
      %s343 = smul.addr %s342, 28
      %s344 = smul.addr %s343, 8
      %s345 = scalar_lea.vmem %s1, %s344
      // Predicated region
      $region25: #{net_forward.6} parent=23 // pred_check
        %p346 = pneg %p56
      $region26: #{net_forward.6} parent=23 // pred_check_branch
        %348 = sbr.rel (%p346) target = $region28
      $region27: #{net_forward.6} parent=23 // pred_region
        _
      $region28: #{net_forward.6} parent=23 // pred_fallthru
        _
    $region24: #{net_forward.6} parent=5 // pred_fallthru
      _
    %p349 = scmp.le.s32.totalorder 2, %s7
    // Predicated region
    $region29: #{net_forward.6} parent=5 // pred_check
      %p350 = pneg %p349
    $region30: #{net_forward.6} parent=5 // pred_check_branch
      %352 = sbr.rel (%p350) target = $region32
    $region31: #{net_forward.6} parent=5 // pred_region
      %s353 = ssub.s32 %s7, 2
      // Predicated region
      $region33: #{net_forward.6} parent=31 // pred_check
        %p354 = pneg %p62
      $region34: #{net_forward.6} parent=31 // pred_check_branch
        %356 = sbr.rel (%p354) target = $region36
      $region35: #{net_forward.6} parent=31 // pred_region
        %p357 = scmp.lt.s32.totalorder %s13, 1
        %s358 = scalar_select %p357, %s13, 1
        %s359 = smul.addr %s358, 28
        %s360 = smul.addr %s359, 8
        %s361 = scalar_lea.vmem %s1, %s360
      $region36: #{net_forward.6} parent=31 // pred_fallthru
        _
    $region32: #{net_forward.6} parent=5 // pred_fallthru
      _
  $region6: #{net_forward.6} parent=0 // loop_footer
    %s11 = sadd.s32 1, %s7
  $region7: #{net_forward.6} parent=0 // loop_footer_branch
    %6 = sbr.rel target = $region3
  $region8: #{net_forward.6} parent=0 // loop_exit
    _

// kernel: net_forward.7
$region0: #{net_forward.7}
  #allocation0 [shape = 'u32[]', space=smem, size = 0x4, offset = 0x4, fixed_abs, tag = 'smem constant byte address 0x4 - core index']
  #allocation1 [shape = 'u32[72,128]{1,0:T(1,128)}', space=vmem, size = 0x9000, scoped, tag = 'internal scratch']
  %s0 = inlined_call_operand.vmem [shape: bf16[200,150], index: 0, kind: input, shape index: {}]
  %s1 = inlined_call_operand.vmem [shape: bf16[150,128], index: 1, kind: input, shape index: {}]
  %s2 = inlined_call_operand.vmem [shape: f32[1,128], index: 2, kind: input, shape index: {}]
  %s3 = inlined_call_operand.vmem [shape: f32[200,128], index: 3, kind: output, shape index: {}]
  %s4 = sld [smem:[#allocation0]]
  $region22: #{net_forward.7} parent=0
    _
  %s6 = ssub.s32 1, %s4
  %s7 = scalar_select 0, %s6, %s4
  // Predicated region
  $region2: #{net_forward.7} parent=0 // pred_check
    _
  $region3: #{net_forward.7} parent=0 // pred_check_branch
    %9 = sbr.rel (0) target = $region5
  $region4: #{net_forward.7} parent=0 // pred_region
    _
  $region5: #{net_forward.7} parent=0 // pred_fallthru
    _
  // Predicated region
  $region6: #{net_forward.7} parent=0 // pred_check
    _
  $region7: #{net_forward.7} parent=0 // pred_check_branch
    %11 = sbr.rel (0) target = $region9
  $region8: #{net_forward.7} parent=0 // pred_region
    _
  $region9: #{net_forward.7} parent=0 // pred_fallthru
    _
  // Predicated region
  $region10: #{net_forward.7} parent=0 // pred_check
    _
  $region11: #{net_forward.7} parent=0 // pred_check_branch
    %13 = sbr.rel (0) target = $region13
  $region12: #{net_forward.7} parent=0 // pred_region
    _
  $region13: #{net_forward.7} parent=0 // pred_fallthru
    _
  %v15 = vld [vmem:[%s0] sm:$0xff]
  %v16 = vld [vmem:[%s0 + $0x8] sm:$0xff]
  %v17 = vld [vmem:[%s0 + $0x10] sm:$0xff]
  %v18 = vld [vmem:[%s0 + $0x18] sm:$0xff]
  %v19 = vld [vmem:[%s0 + $0x20] sm:$0xff]
  %v20 = vld [vmem:[%s0 + $0x28] sm:$0xff]
  %v21 = vld [vmem:[%s0 + $0x30] sm:$0xff]
  %v22 = vld [vmem:[%s0 + $0x38] sm:$0xff]
  %v23 = vld [vmem:[%s0 + $0x40] sm:$0xff]
  %v24 = vld [vmem:[%s0 + $0x48] sm:$0xff]
  %v25 = vld [vmem:[%s0 + $0x50] sm:$0xff]
  %v26 = vld [vmem:[%s0 + $0x58] sm:$0xff]
  %v27 = vld [vmem:[%s0 + $0x60] sm:$0xff]
  %v28 = vld [vmem:[%s0 + $0x68] sm:$0xff]
  %v29 = vld [vmem:[%s0 + $0x70] sm:$0xff]
  %v30 = vld [vmem:[%s0 + $0x78] sm:$0xff]
  %v31 = vld [vmem:[%s0 + $0x80] sm:$0xff]
  %v32 = vld [vmem:[%s0 + $0x88] sm:$0xff]
  %v33 = vld [vmem:[%s0 + $0x90] sm:$0xff]
  %v34 = vld [vmem:[%s0 + $0x98] sm:$0xff]
  %v35 = vld [vmem:[%s0 + $0xa0] sm:$0xff]
  %v36 = vld [vmem:[%s0 + $0xa8] sm:$0xff]
  %v37 = vld [vmem:[%s0 + $0xb0] sm:$0xff]
  %v38 = vld [vmem:[%s0 + $0xb8] sm:$0xff]
  %v39 = vld [vmem:[%s0 + $0xc0] sm:$0xff]
  %v40 = vld [vmem:[%s1] sm:$0xf]
  %v41 = vld [vmem:[%s1 + $0x4] sm:$0xf]
  %v42 = vld [vmem:[%s1 + $0x8] sm:$0xf]
  %v43 = vld [vmem:[%s1 + $0xc] sm:$0xf]
  %v44 = vld [vmem:[%s1 + $0x10] sm:$0xf]
  %v45 = vld [vmem:[%s1 + $0x14] sm:$0xf]
  %v46 = vld [vmem:[%s1 + $0x18] sm:$0xf]
  %v47 = vld [vmem:[%s1 + $0x1c] sm:$0xf]
  %v48 = vld [vmem:[%s1 + $0x20] sm:$0xf]
  %v49 = vld [vmem:[%s1 + $0x24] sm:$0xf]
  %v50 = vld [vmem:[%s1 + $0x28] sm:$0xf]
  %v51 = vld [vmem:[%s1 + $0x2c] sm:$0xf]
  %v52 = vld [vmem:[%s1 + $0x30] sm:$0xf]
  %v53 = vld [vmem:[%s1 + $0x34] sm:$0xf]
  %v54 = vld [vmem:[%s1 + $0x38] sm:$0xf]
  %v55 = vld [vmem:[%s1 + $0x3c] sm:$0xf]
  %v56 = vld [vmem:[%s1 + $0x40] sm:$0xf]
  %v57 = vld [vmem:[%s1 + $0x44] sm:$0xf]
  %v58 = vld [vmem:[%s1 + $0x48] sm:$0x7]
  %v59 = vld [vmem:[%s2] sm:$0x1]
  %v61 = vperm.slane %v59, 0
  %v88 = vunpack.c.l.b16 %v15
  %v89 = vunpack.c.h.b16 %v15
  %v90 = vunpack.c.l.b16 %v16
  %v91 = vunpack.c.h.b16 %v16
  %v92 = vunpack.c.l.b16 %v17
  %v93 = vunpack.c.h.b16 %v17
  %v94 = vunpack.c.l.b16 %v18
  %v95 = vunpack.c.h.b16 %v18
  %v96 = vunpack.c.l.b16 %v19
  %v97 = vunpack.c.h.b16 %v19
  %v98 = vunpack.c.l.b16 %v20
  %v99 = vunpack.c.h.b16 %v20
  %v100 = vunpack.c.l.b16 %v21
  %v101 = vunpack.c.h.b16 %v21
  %v102 = vunpack.c.l.b16 %v22
  %v103 = vunpack.c.h.b16 %v22
  %v104 = vunpack.c.l.b16 %v23
  %v105 = vunpack.c.h.b16 %v23
  %v106 = vunpack.c.l.b16 %v24
  %v107 = vunpack.c.h.b16 %v24
  %v108 = vunpack.c.l.b16 %v25
  %v109 = vunpack.c.h.b16 %v25
  %v110 = vunpack.c.l.b16 %v26
  %v111 = vunpack.c.h.b16 %v26
  %v112 = vunpack.c.l.b16 %v27
  %v113 = vunpack.c.h.b16 %v27
  %v114 = vunpack.c.l.b16 %v28
  %v115 = vunpack.c.h.b16 %v28
  %v116 = vunpack.c.l.b16 %v29
  %v117 = vunpack.c.h.b16 %v29
  %v118 = vunpack.c.l.b16 %v30
  %v119 = vunpack.c.h.b16 %v30
  %v120 = vunpack.c.l.b16 %v31
  %v121 = vunpack.c.h.b16 %v31
  %v122 = vunpack.c.l.b16 %v32
  %v123 = vunpack.c.h.b16 %v32
  %v124 = vunpack.c.l.b16 %v33
  %v125 = vunpack.c.h.b16 %v33
  %v126 = vunpack.c.l.b16 %v34
  %v127 = vunpack.c.h.b16 %v34
  %v128 = vunpack.c.l.b16 %v35
  %v129 = vunpack.c.h.b16 %v35
  %v130 = vunpack.c.l.b16 %v36
  %v131 = vunpack.c.h.b16 %v36
  %v132 = vunpack.c.l.b16 %v37
  %v133 = vunpack.c.h.b16 %v37
  %v134 = vunpack.c.l.b16 %v38
  %v135 = vunpack.c.h.b16 %v38
  %v136 = vunpack.c.l.b16 %v39
  %v137 = vunpack.c.h.b16 %v39
  %v138 = vpack.c.b16 %v90, %v88
  %v139 = vpack.c.b16 %v91, %v89
  %v140 = vpack.c.b16 %v94, %v92
  %v141 = vpack.c.b16 %v95, %v93
  %v142 = vpack.c.b16 %v98, %v96
  %v143 = vpack.c.b16 %v99, %v97
  %v144 = vpack.c.b16 %v102, %v100
  %v145 = vpack.c.b16 %v103, %v101
  %v146 = vpack.c.b16 %v106, %v104
  %v147 = vpack.c.b16 %v107, %v105
  %v148 = vpack.c.b16 %v110, %v108
  %v149 = vpack.c.b16 %v111, %v109
  %v150 = vpack.c.b16 %v114, %v112
  %v151 = vpack.c.b16 %v115, %v113
  %v152 = vpack.c.b16 %v118, %v116
  %v153 = vpack.c.b16 %v119, %v117
  %v154 = vpack.c.b16 %v122, %v120
  %v155 = vpack.c.b16 %v123, %v121
  %v156 = vpack.c.b16 %v126, %v124
  %v157 = vpack.c.b16 %v127, %v125
  %v158 = vpack.c.b16 %v130, %v128
  %v159 = vpack.c.b16 %v131, %v129
  %v160 = vpack.c.b16 %v134, %v132
  %v161 = vpack.c.b16 %v135, %v133
  %v162 = vpack.c.b16 %v136, %v136
  %v163 = vpack.c.b16 %v137, %v137
  %v196 = vunpack.c.l.b16 %v40
  %v197 = vunpack.c.l.b16 %v41
  %v198 = vunpack.c.l.b16 %v42
  %v199 = vunpack.c.l.b16 %v43
  %v200 = vunpack.c.l.b16 %v44
  %v201 = vunpack.c.l.b16 %v45
  %v202 = vunpack.c.l.b16 %v46
  %v203 = vunpack.c.l.b16 %v47
  %v204 = vunpack.c.l.b16 %v48
  %v205 = vunpack.c.l.b16 %v49
  %v206 = vunpack.c.l.b16 %v50
  %v207 = vunpack.c.l.b16 %v51
  %v208 = vunpack.c.l.b16 %v52
  %v209 = vunpack.c.l.b16 %v53
  %v210 = vunpack.c.l.b16 %v54
  %v211 = vunpack.c.l.b16 %v55
  %v212 = vunpack.c.l.b16 %v56
  %v213 = vunpack.c.l.b16 %v57
  %v214 = vunpack.c.l.b16 %v58
  %v215 = vpack.c.b16 %v197, %v196
  %v216 = vpack.c.b16 %v199, %v198
  %v217 = vpack.c.b16 %v201, %v200
  %v218 = vpack.c.b16 %v203, %v202
  %v219 = vpack.c.b16 %v205, %v204
  %v220 = vpack.c.b16 %v207, %v206
  %v221 = vpack.c.b16 %v209, %v208
  %v222 = vpack.c.b16 %v211, %v210
  %v223 = vpack.c.b16 %v213, %v212
  %v224 = vpack.c.b16 %v214, %v214
  %vm234 = vcmask 179200
  %v236 = vsel %vm234, %v139, 0
  %v239 = vsel %vm234, %v141, 0
  %v242 = vsel %vm234, %v143, 0
  %v245 = vsel %vm234, %v145, 0
  %v248 = vsel %vm234, %v147, 0
  %v251 = vsel %vm234, %v149, 0
  %v254 = vsel %vm234, %v151, 0
  %v257 = vsel %vm234, %v153, 0
  %v260 = vsel %vm234, %v155, 0
  %v263 = vsel %vm234, %v157, 0
  %v266 = vsel %vm234, %v159, 0
  %v269 = vsel %vm234, %v161, 0
  %v272 = vsel %vm234, %v163, 0
  %vm274 = vcmask 1042432
  %v276 = vsel %vm274, %v224, 0
  %278 = vmatpush.bf16.msra.mxu0 %v222
  %279 = vmatpush.bf16.msra.mxu0 %v221
  %280 = vmatpush.bf16.msra.mxu0 %v220
  %281 = vmatpush.bf16.msra.mxu0 %v219
  %282 = vmatpush.bf16.msra.mxu0 %v218
  %283 = vmatpush.bf16.msra.mxu0 %v217
  %284 = vmatpush.bf16.msra.mxu0 %v216
  %285 = vmatpush.bf16.msra.mxu0 %v215
  %286 = vmatmul.bf16.gmra.mxu0 %v138
  %v287 = vpop.f32.mrf.mxu0
  %v288 = vadd.f32 %v61, %v287
  %v289 = vpop.f32.mrf.mxu0
  %v290 = vadd.f32 %v61, %v289
  %291 = vmatmul.bf16.gmra.mxu0 %v140
  %v292 = vpop.f32.mrf.mxu0
  %v293 = vadd.f32 %v61, %v292
  %v294 = vpop.f32.mrf.mxu0
  %v295 = vadd.f32 %v61, %v294
  %296 = vmatmul.bf16.gmra.mxu0 %v142
  %v297 = vpop.f32.mrf.mxu0
  %v298 = vadd.f32 %v61, %v297
  %v299 = vpop.f32.mrf.mxu0
  %v300 = vadd.f32 %v61, %v299
  %301 = vmatmul.bf16.gmra.mxu0 %v144
  %v302 = vpop.f32.mrf.mxu0
  %v303 = vadd.f32 %v61, %v302
  %v304 = vpop.f32.mrf.mxu0
  %v305 = vadd.f32 %v61, %v304
  %306 = vmatmul.bf16.gmra.mxu0 %v146
  %v307 = vpop.f32.mrf.mxu0
  %v308 = vadd.f32 %v61, %v307
  %v309 = vpop.f32.mrf.mxu0
  %v310 = vadd.f32 %v61, %v309
  %311 = vmatmul.bf16.gmra.mxu0 %v148
  %v312 = vpop.f32.mrf.mxu0
  %v313 = vadd.f32 %v61, %v312
  %v314 = vpop.f32.mrf.mxu0
  %v315 = vadd.f32 %v61, %v314
  %316 = vmatmul.bf16.gmra.mxu0 %v150
  %v317 = vpop.f32.mrf.mxu0
  %v318 = vadd.f32 %v61, %v317
  %v319 = vpop.f32.mrf.mxu0
  %v320 = vadd.f32 %v61, %v319
  %321 = vmatmul.bf16.gmra.mxu0 %v152
  %v322 = vpop.f32.mrf.mxu0
  %v323 = vadd.f32 %v61, %v322
  %v324 = vpop.f32.mrf.mxu0
  %v325 = vadd.f32 %v61, %v324
  %326 = vmatmul.bf16.gmra.mxu0 %v154
  %v327 = vpop.f32.mrf.mxu0
  %v328 = vadd.f32 %v61, %v327
  %v329 = vpop.f32.mrf.mxu0
  %v330 = vadd.f32 %v61, %v329
  %331 = vmatmul.bf16.gmra.mxu0 %v156
  %v332 = vpop.f32.mrf.mxu0
  %v333 = vadd.f32 %v61, %v332
  %v334 = vpop.f32.mrf.mxu0
  %v335 = vadd.f32 %v61, %v334
  %336 = vmatmul.bf16.gmra.mxu0 %v158
  %v337 = vpop.f32.mrf.mxu0
  %v338 = vadd.f32 %v61, %v337
  %v339 = vpop.f32.mrf.mxu0
  %v340 = vadd.f32 %v61, %v339
  %341 = vmatmul.bf16.gmra.mxu0 %v160
  %v342 = vpop.f32.mrf.mxu0
  %v343 = vadd.f32 %v61, %v342
  %v344 = vpop.f32.mrf.mxu0
  %v345 = vadd.f32 %v61, %v344
  %346 = vmatmul.bf16.gmra.mxu0 %v162
  %v347 = vpop.f32.mrf.mxu0
  %v348 = vadd.f32 %v61, %v347
  %v349 = vpop.f32.mrf.mxu0
  %350 = vdwg.mxu0
  %351 = vmatpush.bf16.msra.mxu0 0
  %352 = vmatpush.bf16.msra.mxu0 0
  %353 = vmatpush.bf16.msra.mxu0 0
  %354 = vmatpush.bf16.msra.mxu0 0
  %355 = vmatpush.bf16.msra.mxu0 0
  %356 = vmatpush.bf16.msra.mxu0 0
  %357 = vmatpush.bf16.msra.mxu0 %v276
  %358 = vmatpush.bf16.msra.mxu0 %v223
  %359 = vmatmul.bf16.gmra.mxu0 %v236
  %v360 = vpop.f32.mrf.mxu0
  %v361 = vadd.f32 %v288, %v360
  %v362 = vpop.f32.mrf.mxu0
  %v363 = vadd.f32 %v290, %v362
  %364 = vmatmul.bf16.gmra.mxu0 %v239
  %v365 = vpop.f32.mrf.mxu0
  %v366 = vadd.f32 %v293, %v365
  %v367 = vpop.f32.mrf.mxu0
  %v368 = vadd.f32 %v295, %v367
  %369 = vmatmul.bf16.gmra.mxu0 %v242
  %v370 = vpop.f32.mrf.mxu0
  %v371 = vadd.f32 %v298, %v370
  %v372 = vpop.f32.mrf.mxu0
  %v373 = vadd.f32 %v300, %v372
  %374 = vmatmul.bf16.gmra.mxu0 %v245
  %v375 = vpop.f32.mrf.mxu0
  %v376 = vadd.f32 %v303, %v375
  %v377 = vpop.f32.mrf.mxu0
  %v378 = vadd.f32 %v305, %v377
  %379 = vmatmul.bf16.gmra.mxu0 %v248
  %v380 = vpop.f32.mrf.mxu0
  %v381 = vadd.f32 %v308, %v380
  %v382 = vpop.f32.mrf.mxu0
  %v383 = vadd.f32 %v310, %v382
  %384 = vmatmul.bf16.gmra.mxu0 %v251
  %v385 = vpop.f32.mrf.mxu0
  %v386 = vadd.f32 %v313, %v385
  %v387 = vpop.f32.mrf.mxu0
  %v388 = vadd.f32 %v315, %v387
  %389 = vmatmul.bf16.gmra.mxu0 %v254
  %v390 = vpop.f32.mrf.mxu0
  %v391 = vadd.f32 %v318, %v390
  %v392 = vpop.f32.mrf.mxu0
  %v393 = vadd.f32 %v320, %v392
  %394 = vmatmul.bf16.gmra.mxu0 %v257
  %v395 = vpop.f32.mrf.mxu0
  %v396 = vadd.f32 %v323, %v395
  %v397 = vpop.f32.mrf.mxu0
  %v398 = vadd.f32 %v325, %v397
  %399 = vmatmul.bf16.gmra.mxu0 %v260
  %v400 = vpop.f32.mrf.mxu0
  %v401 = vadd.f32 %v328, %v400
  %v402 = vpop.f32.mrf.mxu0
  %v403 = vadd.f32 %v330, %v402
  %404 = vmatmul.bf16.gmra.mxu0 %v263
  %v405 = vpop.f32.mrf.mxu0
  %v406 = vadd.f32 %v333, %v405
  %v407 = vpop.f32.mrf.mxu0
  %v408 = vadd.f32 %v335, %v407
  %409 = vmatmul.bf16.gmra.mxu0 %v266
  %v410 = vpop.f32.mrf.mxu0
  %v411 = vadd.f32 %v338, %v410
  %v412 = vpop.f32.mrf.mxu0
  %v413 = vadd.f32 %v340, %v412
  %414 = vmatmul.bf16.gmra.mxu0 %v269
  %v415 = vpop.f32.mrf.mxu0
  %v416 = vadd.f32 %v343, %v415
  %v417 = vpop.f32.mrf.mxu0
  %v418 = vadd.f32 %v345, %v417
  %419 = vmatmul.bf16.gmra.mxu0 %v272
  %v420 = vpop.f32.mrf.mxu0
  %v421 = vadd.f32 %v348, %v420
  %v422 = vpop.f32.mrf.mxu0
  %423 = vdwg.mxu0
  %v424 = vmax.f32 %v361, 0.0
  %v425 = vmax.f32 %v363, 0.0
  %v426 = vmax.f32 %v366, 0.0
  %v427 = vmax.f32 %v368, 0.0
  %v428 = vmax.f32 %v371, 0.0
  %v429 = vmax.f32 %v373, 0.0
  %v430 = vmax.f32 %v376, 0.0
  %v431 = vmax.f32 %v378, 0.0
  %v432 = vmax.f32 %v381, 0.0
  %v433 = vmax.f32 %v383, 0.0
  %v434 = vmax.f32 %v386, 0.0
  %v435 = vmax.f32 %v388, 0.0
  %v436 = vmax.f32 %v391, 0.0
  %v437 = vmax.f32 %v393, 0.0
  %v438 = vmax.f32 %v396, 0.0
  %v439 = vmax.f32 %v398, 0.0
  %v440 = vmax.f32 %v401, 0.0
  %v441 = vmax.f32 %v403, 0.0
  %v442 = vmax.f32 %v406, 0.0
  %v443 = vmax.f32 %v408, 0.0
  %v444 = vmax.f32 %v411, 0.0
  %v445 = vmax.f32 %v413, 0.0
  %v446 = vmax.f32 %v416, 0.0
  %v447 = vmax.f32 %v418, 0.0
  %v448 = vmax.f32 %v421, 0.0
  %449 = vst [vmem:[%s3] sm:$0xff] %v424
  %450 = vst [vmem:[%s3 + $0x8] sm:$0xff] %v425
  %451 = vst [vmem:[%s3 + $0x10] sm:$0xff] %v426
  %452 = vst [vmem:[%s3 + $0x18] sm:$0xff] %v427
  %453 = vst [vmem:[%s3 + $0x20] sm:$0xff] %v428
  %454 = vst [vmem:[%s3 + $0x28] sm:$0xff] %v429
  %455 = vst [vmem:[%s3 + $0x30] sm:$0xff] %v430
  %456 = vst [vmem:[%s3 + $0x38] sm:$0xff] %v431
  %457 = vst [vmem:[%s3 + $0x40] sm:$0xff] %v432
  %458 = vst [vmem:[%s3 + $0x48] sm:$0xff] %v433
  %459 = vst [vmem:[%s3 + $0x50] sm:$0xff] %v434
  %460 = vst [vmem:[%s3 + $0x58] sm:$0xff] %v435
  %461 = vst [vmem:[%s3 + $0x60] sm:$0xff] %v436
  %462 = vst [vmem:[%s3 + $0x68] sm:$0xff] %v437
  %463 = vst [vmem:[%s3 + $0x70] sm:$0xff] %v438
  %464 = vst [vmem:[%s3 + $0x78] sm:$0xff] %v439
  %465 = vst [vmem:[%s3 + $0x80] sm:$0xff] %v440
  %466 = vst [vmem:[%s3 + $0x88] sm:$0xff] %v441
  %467 = vst [vmem:[%s3 + $0x90] sm:$0xff] %v442
  %468 = vst [vmem:[%s3 + $0x98] sm:$0xff] %v443
  %469 = vst [vmem:[%s3 + $0xa0] sm:$0xff] %v444
  %470 = vst [vmem:[%s3 + $0xa8] sm:$0xff] %v445
  %471 = vst [vmem:[%s3 + $0xb0] sm:$0xff] %v446
  %472 = vst [vmem:[%s3 + $0xb8] sm:$0xff] %v447
  %473 = vst [vmem:[%s3 + $0xc0] sm:$0xff] %v448
  // Predicated region
  $region14: #{net_forward.7} parent=0 // pred_check
    _
  $region15: #{net_forward.7} parent=0 // pred_check_branch
    %475 = sbr.rel (0) target = $region17
  $region16: #{net_forward.7} parent=0 // pred_region
    _
  $region17: #{net_forward.7} parent=0 // pred_fallthru
    _
  // Predicated region
  $region18: #{net_forward.7} parent=0 // pred_check
    _
  $region19: #{net_forward.7} parent=0 // pred_check_branch
    %477 = sbr.rel (0) target = $region21
  $region20: #{net_forward.7} parent=0 // pred_region
    _
  $region21: #{net_forward.7} parent=0 // pred_fallthru
    _

// kernel: net_forward.8
$region0: #{net_forward.8}
  #allocation0 [shape = 'u32[]', space=smem, size = 0x4, offset = 0x4, fixed_abs, tag = 'smem constant byte address 0x4 - core index']
  #allocation1 [shape = 'u32[72,128]{1,0:T(1,128)}', space=vmem, size = 0x9000, scoped, tag = 'internal scratch']
  %s0 = inlined_call_operand.vmem [shape: f32[2,5,2,5,256], index: 0, kind: input, shape index: {}]
  %s1 = inlined_call_operand.vmem [shape: f32[2,5,5,128], index: 1, kind: output, shape index: {}]
  %s2 = sld [smem:[#allocation0]]
  $region37: #{net_forward.8} parent=0
    _
  %s4 = ssub.s32 1, %s2
  %s5 = scalar_select 0, %s4, %s2
  loop: start=0, step=1, limit=4
  $region2: #{net_forward.8} parent=0 // loop_pre_header
    _
  $region3: #{net_forward.8} parent=0 // loop_header
    %s7 = sphi 0, %s11
    %p8 = scmp.ge.s32.totalorder %s7, 4
    %s17 = sphi 0, %s19
    %s20 = sphi 0, %s17
    %s21 = sphi 0, %s20
    %s37 = sphi 0, %s21
    %s43 = sphi 0, %s45
    %s46 = sphi 0, %s43
    %s47 = sphi 0, %s46
    %s63 = sphi 0, %s47
  $region4: #{net_forward.8} parent=0 // loop_header_branch
    %10 = sbr.rel (%p8) target = $region8
  $region5: #{net_forward.8} parent=0 // loop_body
    %s12 = ssub.s32 %s7, 1
    %s13 = ssub.s32 %s7, 2
    %s14 = sadd.s32 %s7, 1
    %s15 = ssub.s32 %s7, %s14
    %p16 = scmp.eq.s32.totalorder %s15, 0
    %s18 = sadd.s32 %s17, 1
    %s19 = scalar_select %p16, %s17, %s18
    %p22 = pneg %p16
    %p23 = scmp.eq.s32.totalorder %s7, 1
    %p24 = por %p22, %p23
    %p25 = scmp.ne.s32.totalorder %s17, %s20
    %p26 = scmp.eq.s32.totalorder %s7, 0
    %p27 = por %p25, %p26
    %p28 = scmp.ne.s32.totalorder %s17, %s20
    %p29 = scmp.eq.s32.totalorder %s12, 1
    %p30 = por %p28, %p29
    %p31 = scmp.ne.s32.totalorder %s20, %s21
    %p32 = scmp.eq.s32.totalorder %s12, 0
    %p33 = por %p31, %p32
    %p34 = scmp.ne.s32.totalorder %s20, %s21
    %p35 = scmp.eq.s32.totalorder %s13, 1
    %p36 = por %p34, %p35
    %p38 = scmp.ne.s32.totalorder %s21, %s37
    %p39 = scmp.eq.s32.totalorder %s13, 0
    %p40 = por %p38, %p39
    %s41 = ssub.s32 %s7, %s14
    %p42 = scmp.eq.s32.totalorder %s41, 0
    %s44 = sadd.s32 %s43, 1
    %s45 = scalar_select %p42, %s43, %s44
    %p48 = pneg %p42
    %p49 = scmp.eq.s32.totalorder %s7, 1
    %p50 = por %p48, %p49
    %p51 = scmp.ne.s32.totalorder %s43, %s46
    %p52 = scmp.eq.s32.totalorder %s7, 0
    %p53 = por %p51, %p52
    %p54 = scmp.ne.s32.totalorder %s43, %s46
    %p55 = scmp.eq.s32.totalorder %s12, 1
    %p56 = por %p54, %p55
    %p57 = scmp.ne.s32.totalorder %s46, %s47
    %p58 = scmp.eq.s32.totalorder %s12, 0
    %p59 = por %p57, %p58
    %p60 = scmp.ne.s32.totalorder %s46, %s47
    %p61 = scmp.eq.s32.totalorder %s13, 1
    %p62 = por %p60, %p61
    %p64 = scmp.ne.s32.totalorder %s47, %s63
    %p65 = scmp.eq.s32.totalorder %s13, 0
    %p66 = por %p64, %p65
    %p67 = scmp.le.s32.totalorder 1, %s7
    %p68 = scmp.lt.s32.totalorder %s7, 3
    %p69 = pnand %p67, %p68
    %p70 = pneg %p69
    // Predicated region
    $region9: #{net_forward.8} parent=5 // pred_check
      _
    $region10: #{net_forward.8} parent=5 // pred_check_branch
      %72 = sbr.rel (%p69) target = $region12
    $region11: #{net_forward.8} parent=5 // pred_region
      %s73 = ssub.s32 %s7, 1
    $region12: #{net_forward.8} parent=5 // pred_fallthru
      _
    %p74 = scmp.lt.s32.totalorder %s7, 2
    // Predicated region
    $region13: #{net_forward.8} parent=5 // pred_check
      %p75 = pneg %p74
    $region14: #{net_forward.8} parent=5 // pred_check_branch
      %77 = sbr.rel (%p75) target = $region16
    $region15: #{net_forward.8} parent=5 // pred_region
      // Predicated region
      $region17: #{net_forward.8} parent=15 // pred_check
        %p78 = pneg %p27
      $region18: #{net_forward.8} parent=15 // pred_check_branch
        %80 = sbr.rel (%p78) target = $region20
      $region19: #{net_forward.8} parent=15 // pred_region
        %p81 = scmp.lt.s32.totalorder %s7, 1
        %s82 = scalar_select %p81, %s7, 1
        %s83 = smul.addr %s82, 20
        %s84 = smul.addr %s83, 8
        %s85 = scalar_lea.vmem %s0, %s84
      $region20: #{net_forward.8} parent=15 // pred_fallthru
        _
    $region16: #{net_forward.8} parent=5 // pred_fallthru
      _
    %p86 = scmp.le.s32.totalorder 1, %s7
    %p87 = scmp.lt.s32.totalorder %s7, 3
    %p88 = pnand %p86, %p87
    %p89 = pneg %p88
    // Predicated region
    $region21: #{net_forward.8} parent=5 // pred_check
      _
    $region22: #{net_forward.8} parent=5 // pred_check_branch
      %91 = sbr.rel (%p88) target = $region24
    $region23: #{net_forward.8} parent=5 // pred_region
      %s92 = ssub.s32 %s7, 1
      %p93 = scmp.lt.s32.totalorder %s12, 1
      %s94 = scalar_select %p93, %s12, 1
      %s95 = smul.addr %s94, 20
      %s96 = smul.addr %s95, 8
      %s97 = scalar_lea.vmem %s0, %s96
      %p98 = pneg %p33
      %p99 = pneg %p30
      %p100 = pneg %p59
      %p101 = pneg %p56
      %p102 = scmp.lt.s32.totalorder %s12, 1
      %s103 = scalar_select %p102, %s12, 1
      %s104 = smul.addr %s103, 5
      %s105 = smul.addr %s104, 8
      %s106 = scalar_lea.vmem %s1, %s105
      %p107 = scmp.lt.s32.totalorder %s12, 1
      %s108 = scalar_select %p107, %s12, 1
      %s109 = smul.addr %s108, 20
      %s110 = smul.addr %s109, 8
      %s111 = scalar_lea.vmem %s0, %s110
      %p112 = scmp.lt.s32.totalorder %s12, 1
      %s113 = scalar_select %p112, %s12, 1
      %s114 = smul.addr %s113, 5
      %s115 = smul.addr %s114, 8
      %s116 = scalar_lea.vmem %s1, %s115
      %v117 = vld [vmem:[%s111] sm:$0x1f]
      %v118 = vld [vmem:[%s111 + $0x8] sm:$0x1f]
      %v119 = vld [vmem:[%s111 + $0x10] sm:$0x1f]
      %v120 = vld [vmem:[%s111 + $0x18] sm:$0x1f]
      %v121 = vld [vmem:[%s111 + $0x20] sm:$0x1f]
      %v122 = vld [vmem:[%s111 + $0x28] sm:$0x1f]
      %v123 = vld [vmem:[%s111 + $0x30] sm:$0x1f]
      %v124 = vld [vmem:[%s111 + $0x38] sm:$0x1f]
      %v125 = vld [vmem:[%s111 + $0x40] sm:$0x1f]
      %v126 = vld [vmem:[%s111 + $0x48] sm:$0x1f]
      %v127 = vld [vmem:[%s111 + $0x50] sm:$0x1f]
      %v128 = vld [vmem:[%s111 + $0x58] sm:$0x1f]
      %v129 = vld [vmem:[%s111 + $0x60] sm:$0x1f]
      %v130 = vld [vmem:[%s111 + $0x68] sm:$0x1f]
      %v131 = vld [vmem:[%s111 + $0x70] sm:$0x1f]
      %v132 = vld [vmem:[%s111 + $0x78] sm:$0x1f]
      %v133 = vld [vmem:[%s111 + $0x80] sm:$0x1f]
      %v134 = vld [vmem:[%s111 + $0x88] sm:$0x1f]
      %v135 = vld [vmem:[%s111 + $0x90] sm:$0x1f]
      %v136 = vld [vmem:[%s111 + $0x98] sm:$0x1f]
      %v137 = vmax.f32 %v117, %v119
      %v138 = vmax.f32 %v118, %v120
      %v139 = vmax.f32 %v121, %v123
      %v140 = vmax.f32 %v122, %v124
      %v141 = vmax.f32 %v125, %v127
      %v142 = vmax.f32 %v126, %v128
      %v143 = vmax.f32 %v129, %v131
      %v144 = vmax.f32 %v130, %v132
      %v145 = vmax.f32 %v133, %v135
      %v146 = vmax.f32 %v134, %v136
      %v147 = vmax.f32 %v137, %v138
      %v148 = vmax.f32 %v139, %v140
      %v149 = vmax.f32 %v141, %v142
      %v150 = vmax.f32 %v143, %v144
      %v151 = vmax.f32 %v145, %v146
      %152 = vst [vmem:[%s116] sm:$0x1f] %v147
      %153 = vst [vmem:[%s116 + $0x8] sm:$0x1f] %v148
      %154 = vst [vmem:[%s116 + $0x10] sm:$0x1f] %v149
      %155 = vst [vmem:[%s116 + $0x18] sm:$0x1f] %v150
      %156 = vst [vmem:[%s116 + $0x20] sm:$0x1f] %v151
      %p157 = scmp.lt.s32.totalorder %s12, 1
      %s158 = scalar_select %p157, %s12, 1
      %s159 = smul.addr %s158, 5
      %s160 = smul.addr %s159, 8
      %s161 = scalar_lea.vmem %s1, %s160
      // Predicated region
      $region25: #{net_forward.8} parent=23 // pred_check
        %p162 = pneg %p56
      $region26: #{net_forward.8} parent=23 // pred_check_branch
        %164 = sbr.rel (%p162) target = $region28
      $region27: #{net_forward.8} parent=23 // pred_region
        _
      $region28: #{net_forward.8} parent=23 // pred_fallthru
        _
    $region24: #{net_forward.8} parent=5 // pred_fallthru
      _
    %p165 = scmp.le.s32.totalorder 2, %s7
    // Predicated region
    $region29: #{net_forward.8} parent=5 // pred_check
      %p166 = pneg %p165
    $region30: #{net_forward.8} parent=5 // pred_check_branch
      %168 = sbr.rel (%p166) target = $region32
    $region31: #{net_forward.8} parent=5 // pred_region
      %s169 = ssub.s32 %s7, 2
      // Predicated region
      $region33: #{net_forward.8} parent=31 // pred_check
        %p170 = pneg %p62
      $region34: #{net_forward.8} parent=31 // pred_check_branch
        %172 = sbr.rel (%p170) target = $region36
      $region35: #{net_forward.8} parent=31 // pred_region
        %p173 = scmp.lt.s32.totalorder %s13, 1
        %s174 = scalar_select %p173, %s13, 1
        %s175 = smul.addr %s174, 5
        %s176 = smul.addr %s175, 8
        %s177 = scalar_lea.vmem %s1, %s176
      $region36: #{net_forward.8} parent=31 // pred_fallthru
        _
    $region32: #{net_forward.8} parent=5 // pred_fallthru
      _
  $region6: #{net_forward.8} parent=0 // loop_footer
    %s11 = sadd.s32 1, %s7
  $region7: #{net_forward.8} parent=0 // loop_footer_branch
    %6 = sbr.rel target = $region3
  $region8: #{net_forward.8} parent=0 // loop_exit
    _

// kernel: net_forward.9
$region0: #{net_forward.9}
  #allocation0 [shape = 'u32[]', space=smem, size = 0x4, offset = 0x4, fixed_abs, tag = 'smem constant byte address 0x4 - core index']
  #allocation1 [shape = 'u32[72,128]{1,0:T(1,128)}', space=vmem, size = 0x9000, scoped, tag = 'internal scratch']
  %s0 = inlined_call_operand.vmem [shape: bf16[2,400], index: 0, kind: input, shape index: {}]
  %s1 = inlined_call_operand.vmem [shape: bf16[400,128], index: 1, kind: input, shape index: {}]
  %s2 = inlined_call_operand.vmem [shape: f32[1,128], index: 2, kind: input, shape index: {}]
  %s3 = inlined_call_operand.vmem [shape: bf16[128,128], index: 3, kind: input, shape index: {}]
  %s4 = inlined_call_operand.vmem [shape: f32[1,128], index: 4, kind: input, shape index: {}]
  %s5 = inlined_call_operand.vmem [shape: bf16[128,128], index: 5, kind: input, shape index: {}]
  %s6 = inlined_call_operand.vmem [shape: f32[1,128], index: 6, kind: input, shape index: {}]
  %s7 = inlined_call_operand.hbm [shape: f32[2,128], index: 7, kind: output, shape index: {}]
  %s8 = sld [smem:[#allocation0]]
  $region38: #{net_forward.9} parent=0
    _
  %s10 = ssub.s32 1, %s8
  %s11 = scalar_select 0, %s10, %s8
  $region1: #{net_forward.9} parent=0
    #allocation2 [shape = 'u8[1024]{0}', space=vmem, size = 0x400, scoped, tag = 'output window, operand 0, single buffered']
    #allocation3 [shape = 's32[1]{0}', space=sflag, size = 0x4, scoped, tag = 'scoped memory for net_forward.9']
    %12 = vsyncpa [#allocation3], 0
    // Predicated region
    $region2: #{net_forward.9} parent=1 // pred_check
      _
    $region3: #{net_forward.9} parent=1 // pred_check_branch
      %14 = sbr.rel (0) target = $region5
    $region4: #{net_forward.9} parent=1 // pred_region
      _
    $region5: #{net_forward.9} parent=1 // pred_fallthru
      _
    // Predicated region
    $region6: #{net_forward.9} parent=1 // pred_check
      _
    $region7: #{net_forward.9} parent=1 // pred_check_branch
      %16 = sbr.rel (0) target = $region9
    $region8: #{net_forward.9} parent=1 // pred_region
      _
    $region9: #{net_forward.9} parent=1 // pred_fallthru
      _
    // Predicated region
    $region10: #{net_forward.9} parent=1 // pred_check
      _
    $region11: #{net_forward.9} parent=1 // pred_check_branch
      %18 = sbr.rel (0) target = $region13
    $region12: #{net_forward.9} parent=1 // pred_region
      _
    $region13: #{net_forward.9} parent=1 // pred_fallthru
      _
    // Predicated region
    $region14: #{net_forward.9} parent=1 // pred_check
      _
    $region15: #{net_forward.9} parent=1 // pred_check_branch
      %20 = sbr.rel (0) target = $region17
    $region16: #{net_forward.9} parent=1 // pred_region
      _
    $region17: #{net_forward.9} parent=1 // pred_fallthru
      _
    // Predicated region
    $region18: #{net_forward.9} parent=1 // pred_check
      _
    $region19: #{net_forward.9} parent=1 // pred_check_branch
      %22 = sbr.rel (0) target = $region21
    $region20: #{net_forward.9} parent=1 // pred_region
      _
    $region21: #{net_forward.9} parent=1 // pred_fallthru
      _
    // Predicated region
    $region22: #{net_forward.9} parent=1 // pred_check
      _
    $region23: #{net_forward.9} parent=1 // pred_check_branch
      %24 = sbr.rel (0) target = $region25
    $region24: #{net_forward.9} parent=1 // pred_region
      _
    $region25: #{net_forward.9} parent=1 // pred_fallthru
      _
    // Predicated region
    $region26: #{net_forward.9} parent=1 // pred_check
      _
    $region27: #{net_forward.9} parent=1 // pred_check_branch
      %26 = sbr.rel (0) target = $region29
    $region28: #{net_forward.9} parent=1 // pred_region
      _
    $region29: #{net_forward.9} parent=1 // pred_fallthru
      _
    %v28 = vld [vmem:[%s0] sm:$0xf]
    %v29 = vld [vmem:[%s1] sm:$0xf]
    %v30 = vld [vmem:[%s1 + $0x4] sm:$0xf]
    %v31 = vld [vmem:[%s1 + $0x8] sm:$0xf]
    %v32 = vld [vmem:[%s1 + $0xc] sm:$0xf]
    %v33 = vld [vmem:[%s1 + $0x10] sm:$0xf]
    %v34 = vld [vmem:[%s1 + $0x14] sm:$0xf]
    %v35 = vld [vmem:[%s1 + $0x18] sm:$0xf]
    %v36 = vld [vmem:[%s1 + $0x1c] sm:$0xf]
    %v37 = vld [vmem:[%s1 + $0x20] sm:$0xf]
    %v38 = vld [vmem:[%s1 + $0x24] sm:$0xf]
    %v39 = vld [vmem:[%s1 + $0x28] sm:$0xf]
    %v40 = vld [vmem:[%s1 + $0x2c] sm:$0xf]
    %v41 = vld [vmem:[%s1 + $0x30] sm:$0xf]
    %v42 = vld [vmem:[%s1 + $0x34] sm:$0xf]
    %v43 = vld [vmem:[%s1 + $0x38] sm:$0xf]
    %v44 = vld [vmem:[%s1 + $0x3c] sm:$0xf]
    %v45 = vld [vmem:[%s1 + $0x40] sm:$0xf]
    %v46 = vld [vmem:[%s1 + $0x44] sm:$0xf]
    %v47 = vld [vmem:[%s1 + $0x48] sm:$0xf]
    %v48 = vld [vmem:[%s1 + $0x4c] sm:$0xf]
    %v49 = vld [vmem:[%s1 + $0x50] sm:$0xf]
    %v50 = vld [vmem:[%s1 + $0x54] sm:$0xf]
    %v51 = vld [vmem:[%s1 + $0x58] sm:$0xf]
    %v52 = vld [vmem:[%s1 + $0x5c] sm:$0xf]
    %v53 = vld [vmem:[%s1 + $0x60] sm:$0xf]
    %v54 = vld [vmem:[%s1 + $0x64] sm:$0xf]
    %v55 = vld [vmem:[%s1 + $0x68] sm:$0xf]
    %v56 = vld [vmem:[%s1 + $0x6c] sm:$0xf]
    %v57 = vld [vmem:[%s1 + $0x70] sm:$0xf]
    %v58 = vld [vmem:[%s1 + $0x74] sm:$0xf]
    %v59 = vld [vmem:[%s1 + $0x78] sm:$0xf]
    %v60 = vld [vmem:[%s1 + $0x7c] sm:$0xf]
    %v61 = vld [vmem:[%s1 + $0x80] sm:$0xf]
    %v62 = vld [vmem:[%s1 + $0x84] sm:$0xf]
    %v63 = vld [vmem:[%s1 + $0x88] sm:$0xf]
    %v64 = vld [vmem:[%s1 + $0x8c] sm:$0xf]
    %v65 = vld [vmem:[%s1 + $0x90] sm:$0xf]
    %v66 = vld [vmem:[%s1 + $0x94] sm:$0xf]
    %v67 = vld [vmem:[%s1 + $0x98] sm:$0xf]
    %v68 = vld [vmem:[%s1 + $0x9c] sm:$0xf]
    %v69 = vld [vmem:[%s1 + $0xa0] sm:$0xf]
    %v70 = vld [vmem:[%s1 + $0xa4] sm:$0xf]
    %v71 = vld [vmem:[%s1 + $0xa8] sm:$0xf]
    %v72 = vld [vmem:[%s1 + $0xac] sm:$0xf]
    %v73 = vld [vmem:[%s1 + $0xb0] sm:$0xf]
    %v74 = vld [vmem:[%s1 + $0xb4] sm:$0xf]
    %v75 = vld [vmem:[%s1 + $0xb8] sm:$0xf]
    %v76 = vld [vmem:[%s1 + $0xbc] sm:$0xf]
    %v77 = vld [vmem:[%s1 + $0xc0] sm:$0xf]
    %v78 = vld [vmem:[%s1 + $0xc4] sm:$0xf]
    %v79 = vld [vmem:[%s2] sm:$0x1]
    %v81 = vperm.slane %v79, 0
    %84 = vst [vmem:[#allocation1] ss:$9 sm:$0xff] %v28
    %v85 = vld [vmem:[#allocation1] sm:$0xff]
    %v86 = vld [vmem:[#allocation1 + $0x9] sm:$0xff]
    %v87 = vld [vmem:[#allocation1 + $0x12] sm:$0xff]
    %v88 = vld [vmem:[#allocation1 + $0x1b] sm:$0xff]
    %v142 = vunpack.c.l.b16 %v29
    %v143 = vunpack.c.l.b16 %v30
    %v144 = vunpack.c.l.b16 %v31
    %v145 = vunpack.c.l.b16 %v32
    %v146 = vunpack.c.l.b16 %v33
    %v147 = vunpack.c.l.b16 %v34
    %v148 = vunpack.c.l.b16 %v35
    %v149 = vunpack.c.l.b16 %v36
    %v150 = vunpack.c.l.b16 %v37
    %v151 = vunpack.c.l.b16 %v38
    %v152 = vunpack.c.l.b16 %v39
    %v153 = vunpack.c.l.b16 %v40
    %v154 = vunpack.c.l.b16 %v41
    %v155 = vunpack.c.l.b16 %v42
    %v156 = vunpack.c.l.b16 %v43
    %v157 = vunpack.c.l.b16 %v44
    %v158 = vunpack.c.l.b16 %v45
    %v159 = vunpack.c.l.b16 %v46
    %v160 = vunpack.c.l.b16 %v47
    %v161 = vunpack.c.l.b16 %v48
    %v162 = vunpack.c.l.b16 %v49
    %v163 = vunpack.c.l.b16 %v50
    %v164 = vunpack.c.l.b16 %v51
    %v165 = vunpack.c.l.b16 %v52
    %v166 = vunpack.c.l.b16 %v53
    %v167 = vunpack.c.l.b16 %v54
    %v168 = vunpack.c.l.b16 %v55
    %v169 = vunpack.c.l.b16 %v56
    %v170 = vunpack.c.l.b16 %v57
    %v171 = vunpack.c.l.b16 %v58
    %v172 = vunpack.c.l.b16 %v59
    %v173 = vunpack.c.l.b16 %v60
    %v174 = vunpack.c.l.b16 %v61
    %v175 = vunpack.c.l.b16 %v62
    %v176 = vunpack.c.l.b16 %v63
    %v177 = vunpack.c.l.b16 %v64
    %v178 = vunpack.c.l.b16 %v65
    %v179 = vunpack.c.l.b16 %v66
    %v180 = vunpack.c.l.b16 %v67
    %v181 = vunpack.c.l.b16 %v68
    %v182 = vunpack.c.l.b16 %v69
    %v183 = vunpack.c.l.b16 %v70
    %v184 = vunpack.c.l.b16 %v71
    %v185 = vunpack.c.l.b16 %v72
    %v186 = vunpack.c.l.b16 %v73
    %v187 = vunpack.c.l.b16 %v74
    %v188 = vunpack.c.l.b16 %v75
    %v189 = vunpack.c.l.b16 %v76
    %v190 = vunpack.c.l.b16 %v77
    %v191 = vunpack.c.l.b16 %v78
    %v192 = vpack.c.b16 %v143, %v142
    %v193 = vpack.c.b16 %v145, %v144
    %v194 = vpack.c.b16 %v147, %v146
    %v195 = vpack.c.b16 %v149, %v148
    %v196 = vpack.c.b16 %v151, %v150
    %v197 = vpack.c.b16 %v153, %v152
    %v198 = vpack.c.b16 %v155, %v154
    %v199 = vpack.c.b16 %v157, %v156
    %v200 = vpack.c.b16 %v159, %v158
    %v201 = vpack.c.b16 %v161, %v160
    %v202 = vpack.c.b16 %v163, %v162
    %v203 = vpack.c.b16 %v165, %v164
    %v204 = vpack.c.b16 %v167, %v166
    %v205 = vpack.c.b16 %v169, %v168
    %v206 = vpack.c.b16 %v171, %v170
    %v207 = vpack.c.b16 %v173, %v172
    %v208 = vpack.c.b16 %v175, %v174
    %v209 = vpack.c.b16 %v177, %v176
    %v210 = vpack.c.b16 %v179, %v178
    %v211 = vpack.c.b16 %v181, %v180
    %v212 = vpack.c.b16 %v183, %v182
    %v213 = vpack.c.b16 %v185, %v184
    %v214 = vpack.c.b16 %v187, %v186
    %v215 = vpack.c.b16 %v189, %v188
    %v216 = vpack.c.b16 %v191, %v190
    %vm242 = vcmask 130048
    %v243 = vsel %vm242, %v88, 0
    %245 = vmatpush.bf16.msra.mxu0 %v199
    %246 = vmatpush.bf16.msra.mxu0 %v198
    %247 = vmatpush.bf16.msra.mxu0 %v197
    %248 = vmatpush.bf16.msra.mxu0 %v196
    %249 = vmatpush.bf16.msra.mxu0 %v195
    %250 = vmatpush.bf16.msra.mxu0 %v194
    %251 = vmatpush.bf16.msra.mxu0 %v193
    %252 = vmatpush.bf16.msra.mxu0 %v192
    %253 = vmatmul.bf16.gmra.mxu0 %v85
    %v254 = vpop.f32.mrf.mxu0
    %v255 = vadd.f32 %v81, %v254
    %v256 = vpop.f32.mrf.mxu0
    %257 = vdwg.mxu0
    %258 = vmatpush.bf16.msra.mxu0 %v207
    %259 = vmatpush.bf16.msra.mxu0 %v206
    %260 = vmatpush.bf16.msra.mxu0 %v205
    %261 = vmatpush.bf16.msra.mxu0 %v204
    %262 = vmatpush.bf16.msra.mxu0 %v203
    %263 = vmatpush.bf16.msra.mxu0 %v202
    %264 = vmatpush.bf16.msra.mxu0 %v201
    %265 = vmatpush.bf16.msra.mxu0 %v200
    %266 = vmatmul.bf16.gmra.mxu0 %v86
    %v267 = vpop.f32.mrf.mxu0
    %v268 = vadd.f32 %v255, %v267
    %v269 = vpop.f32.mrf.mxu0
    %270 = vdwg.mxu0
    %271 = vmatpush.bf16.msra.mxu0 %v215
    %272 = vmatpush.bf16.msra.mxu0 %v214
    %273 = vmatpush.bf16.msra.mxu0 %v213
    %274 = vmatpush.bf16.msra.mxu0 %v212
    %275 = vmatpush.bf16.msra.mxu0 %v211
    %276 = vmatpush.bf16.msra.mxu0 %v210
    %277 = vmatpush.bf16.msra.mxu0 %v209
    %278 = vmatpush.bf16.msra.mxu0 %v208
    %279 = vmatmul.bf16.gmra.mxu0 %v87
    %v280 = vpop.f32.mrf.mxu0
    %v281 = vadd.f32 %v268, %v280
    %v282 = vpop.f32.mrf.mxu0
    %283 = vdwg.mxu0
    %284 = vmatpush.bf16.msra.mxu0 0
    %285 = vmatpush.bf16.msra.mxu0 0
    %286 = vmatpush.bf16.msra.mxu0 0
    %287 = vmatpush.bf16.msra.mxu0 0
    %288 = vmatpush.bf16.msra.mxu0 0
    %289 = vmatpush.bf16.msra.mxu0 0
    %290 = vmatpush.bf16.msra.mxu0 0
    %291 = vmatpush.bf16.msra.mxu0 %v216
    %292 = vmatmul.bf16.gmra.mxu0 %v243
    %v293 = vpop.f32.mrf.mxu0
    %v294 = vadd.f32 %v281, %v293
    %v295 = vpop.f32.mrf.mxu0
    %296 = vdwg.mxu0
    %v297 = vmax.f32 %v294, 0.0
    %v298 = vpack.c.bf16 %v297, %v297
    %v299 = vld [vmem:[%s3] sm:$0xf]
    %v300 = vld [vmem:[%s3 + $0x4] sm:$0xf]
    %v301 = vld [vmem:[%s3 + $0x8] sm:$0xf]
    %v302 = vld [vmem:[%s3 + $0xc] sm:$0xf]
    %v303 = vld [vmem:[%s3 + $0x10] sm:$0xf]
    %v304 = vld [vmem:[%s3 + $0x14] sm:$0xf]
    %v305 = vld [vmem:[%s3 + $0x18] sm:$0xf]
    %v306 = vld [vmem:[%s3 + $0x1c] sm:$0xf]
    %v307 = vld [vmem:[%s3 + $0x20] sm:$0xf]
    %v308 = vld [vmem:[%s3 + $0x24] sm:$0xf]
    %v309 = vld [vmem:[%s3 + $0x28] sm:$0xf]
    %v310 = vld [vmem:[%s3 + $0x2c] sm:$0xf]
    %v311 = vld [vmem:[%s3 + $0x30] sm:$0xf]
    %v312 = vld [vmem:[%s3 + $0x34] sm:$0xf]
    %v313 = vld [vmem:[%s3 + $0x38] sm:$0xf]
    %v314 = vld [vmem:[%s3 + $0x3c] sm:$0xf]
    %v315 = vld [vmem:[%s4] sm:$0x1]
    %v317 = vperm.slane %v315, 0
    %v335 = vunpack.c.l.b16 %v299
    %v336 = vunpack.c.l.b16 %v300
    %v337 = vunpack.c.l.b16 %v301
    %v338 = vunpack.c.l.b16 %v302
    %v339 = vunpack.c.l.b16 %v303
    %v340 = vunpack.c.l.b16 %v304
    %v341 = vunpack.c.l.b16 %v305
    %v342 = vunpack.c.l.b16 %v306
    %v343 = vunpack.c.l.b16 %v307
    %v344 = vunpack.c.l.b16 %v308
    %v345 = vunpack.c.l.b16 %v309
    %v346 = vunpack.c.l.b16 %v310
    %v347 = vunpack.c.l.b16 %v311
    %v348 = vunpack.c.l.b16 %v312
    %v349 = vunpack.c.l.b16 %v313
    %v350 = vunpack.c.l.b16 %v314
    %v351 = vpack.c.b16 %v336, %v335
    %v352 = vpack.c.b16 %v338, %v337
    %v353 = vpack.c.b16 %v340, %v339
    %v354 = vpack.c.b16 %v342, %v341
    %v355 = vpack.c.b16 %v344, %v343
    %v356 = vpack.c.b16 %v346, %v345
    %v357 = vpack.c.b16 %v348, %v347
    %v358 = vpack.c.b16 %v350, %v349
    %367 = vmatpush.bf16.msra.mxu0 %v358
    %368 = vmatpush.bf16.msra.mxu0 %v357
    %369 = vmatpush.bf16.msra.mxu0 %v356
    %370 = vmatpush.bf16.msra.mxu0 %v355
    %371 = vmatpush.bf16.msra.mxu0 %v354
    %372 = vmatpush.bf16.msra.mxu0 %v353
    %373 = vmatpush.bf16.msra.mxu0 %v352
    %374 = vmatpush.bf16.msra.mxu0 %v351
    %375 = vmatmul.bf16.gmra.mxu0 %v298
    %v376 = vpop.f32.mrf.mxu0
    %v377 = vadd.f32 %v317, %v376
    %v378 = vpop.f32.mrf.mxu0
    %379 = vdwg.mxu0
    %v380 = vmax.f32 %v377, 0.0
    %v381 = vpack.c.bf16 %v380, %v380
    %v382 = vld [vmem:[%s5] sm:$0xf]
    %v383 = vld [vmem:[%s5 + $0x4] sm:$0xf]
    %v384 = vld [vmem:[%s5 + $0x8] sm:$0xf]
    %v385 = vld [vmem:[%s5 + $0xc] sm:$0xf]
    %v386 = vld [vmem:[%s5 + $0x10] sm:$0xf]
    %v387 = vld [vmem:[%s5 + $0x14] sm:$0xf]
    %v388 = vld [vmem:[%s5 + $0x18] sm:$0xf]
    %v389 = vld [vmem:[%s5 + $0x1c] sm:$0xf]
    %v390 = vld [vmem:[%s5 + $0x20] sm:$0xf]
    %v391 = vld [vmem:[%s5 + $0x24] sm:$0xf]
    %v392 = vld [vmem:[%s5 + $0x28] sm:$0xf]
    %v393 = vld [vmem:[%s5 + $0x2c] sm:$0xf]
    %v394 = vld [vmem:[%s5 + $0x30] sm:$0xf]
    %v395 = vld [vmem:[%s5 + $0x34] sm:$0xf]
    %v396 = vld [vmem:[%s5 + $0x38] sm:$0xf]
    %v397 = vld [vmem:[%s5 + $0x3c] sm:$0xf]
    %v398 = vld [vmem:[%s6] sm:$0x1]
    %v400 = vperm.slane %v398, 0
    %v418 = vunpack.c.l.b16 %v382
    %v419 = vunpack.c.l.b16 %v383
    %v420 = vunpack.c.l.b16 %v384
    %v421 = vunpack.c.l.b16 %v385
    %v422 = vunpack.c.l.b16 %v386
    %v423 = vunpack.c.l.b16 %v387
    %v424 = vunpack.c.l.b16 %v388
    %v425 = vunpack.c.l.b16 %v389
    %v426 = vunpack.c.l.b16 %v390
    %v427 = vunpack.c.l.b16 %v391
    %v428 = vunpack.c.l.b16 %v392
    %v429 = vunpack.c.l.b16 %v393
    %v430 = vunpack.c.l.b16 %v394
    %v431 = vunpack.c.l.b16 %v395
    %v432 = vunpack.c.l.b16 %v396
    %v433 = vunpack.c.l.b16 %v397
    %v434 = vpack.c.b16 %v419, %v418
    %v435 = vpack.c.b16 %v421, %v420
    %v436 = vpack.c.b16 %v423, %v422
    %v437 = vpack.c.b16 %v425, %v424
    %v438 = vpack.c.b16 %v427, %v426
    %v439 = vpack.c.b16 %v429, %v428
    %v440 = vpack.c.b16 %v431, %v430
    %v441 = vpack.c.b16 %v433, %v432
    %450 = vmatpush.bf16.msra.mxu0 %v441
    %451 = vmatpush.bf16.msra.mxu0 %v440
    %452 = vmatpush.bf16.msra.mxu0 %v439
    %453 = vmatpush.bf16.msra.mxu0 %v438
    %454 = vmatpush.bf16.msra.mxu0 %v437
    %455 = vmatpush.bf16.msra.mxu0 %v436
    %456 = vmatpush.bf16.msra.mxu0 %v435
    %457 = vmatpush.bf16.msra.mxu0 %v434
    %458 = vmatmul.bf16.gmra.mxu0 %v381
    %v459 = vpop.f32.mrf.mxu0
    %v460 = vadd.f32 %v400, %v459
    %v461 = vpop.f32.mrf.mxu0
    %462 = vdwg.mxu0
    %463 = vst [vmem:[#allocation2] sm:$0x3] %v460
    // Predicated region
    $region30: #{net_forward.9} parent=1 // pred_check
      _
    $region31: #{net_forward.9} parent=1 // pred_check_branch
      %465 = sbr.rel (0) target = $region33
    $region32: #{net_forward.9} parent=1 // pred_region
      %467 = vsyncadd [#allocation3], 0
      %s469 = sshll.u32 [#allocation2], 4
      %s470 = int_to_ptr.vmem [resolvable:$true] %s469
      %s471 = sshll.u32 %s7, 4
      %s472 = int_to_ptr.hbm [resolvable:$true] %s471
      %474 = dma.vmem_to_hbm [thread:$0]  %s470, 32, %s472, [#allocation3]
    $region33: #{net_forward.9} parent=1 // pred_fallthru
      _
    // Predicated region
    $region34: #{net_forward.9} parent=1 // pred_check
      _
    $region35: #{net_forward.9} parent=1 // pred_check_branch
      %476 = sbr.rel (0) target = $region37
    $region36: #{net_forward.9} parent=1 // pred_region
      %478 = dma.done [#allocation3], 32
    $region37: #{net_forward.9} parent=1 // pred_fallthru
      _
    %479 = vsyncpa [#allocation3], 1

</llo_original>
